<compile_context>
chip_gen: v6e
topology: v6e:2x2x1
jax: 0.10.0
libtpu: 0.0.40
codegen_flags: <defaults>
</compile_context>

<pallas_src>
import jax
import jax.numpy as jnp
from jax.experimental import pallas as pl
from jax.experimental.pallas import tpu as pltpu


# ---------------------------------------------------------------------------
# Kernel helpers
# ---------------------------------------------------------------------------
def _pool2x2(x):
    """MaxPool2d(2) on an NHWC slab (VPU maxima, no axis reductions).

    x: (2*m, W, C) float32  ->  (m, W//2, C) float32
    """
    m2, w, c = x.shape
    m, wp = m2 // 2, w // 2
    xh = x.reshape(m, 2, w, c)                        # leading-dim split: free
    rmax = jnp.maximum(xh[:, 0], xh[:, 1])            # (m, W, C)
    rw = rmax.reshape(m, wp, 2, c)                    # pair up along W
    return jnp.maximum(rw[:, :, 0, :], rw[:, :, 1, :])


def _conv3x3_relu(pad_ref, w_ref, b_ref, out_rows, wp):
    """3x3 conv + bias + ReLU reading a zero-padded f32 VMEM scratch.

    pad_ref: (out_rows+2, wp+2, cin) f32, 1-px zero halo already in place
    w_ref:   (9*cin, cout) bf16, HWIO weights flattened in (ky, kx, cin) row order
    b_ref:   (1, cout) f32
    returns: (out_rows*wp, cout) f32, post-ReLU
    """
    cin = pad_ref.shape[-1]
    cout = w_ref.shape[-1]
    mxu_dtype = w_ref.dtype

    if cin < 128:
        # Small-C path (toy test): one fused-K im2col matmul.  The slab is built in f32
        # (tiny at small C) and cast to bf16 right before the MXU op.
        taps = [pad_ref[dy:dy + out_rows, dx:dx + wp, :]
                for dy in range(3) for dx in range(3)]
        slab = jnp.concatenate(taps, axis=-1).reshape(out_rows * wp, 9 * cin)
        acc = jnp.dot(slab.astype(mxu_dtype), w_ref[...],
                      preferred_element_type=jnp.float32)
    else:
        # UNet-scale path: 9 accumulated matmuls with K = cin >= 128 -- no materialized
        # im2col slab (removes ~9x slab VMEM traffic; MXU stays equally full).
        acc = jnp.zeros((out_rows * wp, cout), jnp.float32)
        for t in range(9):
            dy, dx = divmod(t, 3)
            tap = pad_ref[dy:dy + out_rows, dx:dx + wp, :].reshape(out_rows * wp, cin)
            acc = acc + jnp.dot(tap.astype(mxu_dtype),
                                w_ref[t * cin:(t + 1) * cin, :],
                                preferred_element_type=jnp.float32)

    return jnp.maximum(acc + b_ref[...].astype(jnp.float32), 0.0)


# ---------------------------------------------------------------------------
# Fused Down kernel: one grid step = one (image, row-block) tile
# ---------------------------------------------------------------------------
def _down_kernel(x_ref, w1_ref, b1_ref, w2_ref, b2_ref, o_ref, pad1_ref, pad2_ref):
    # x_ref   : (1, H, W, Cin)      whole NHWC image (block index is row-axis invariant)
    # o_ref   : (1, RB, Wp, Cout)   RB pooled output rows of this grid step
    # pad1_ref: (RB+4, Wp+2, Cin)   f32 zero-halo'd pooled rows   r0-2 .. r0+RB+1
    # pad2_ref: (RB+2, Wp+2, Cmid)  f32 zero-halo'd conv1 rows    r0-1 .. r0+RB
    cin = x_ref.shape[-1]
    _, rb, wp, cout = o_ref.shape
    cmid = w1_ref.shape[-1]

    hb = pl.program_id(1)
    nhb = pl.num_programs(1)
    r0 = hb * rb                               # first pooled / output row of this block

    # ---- border-only memsets (interior is fully overwritten below; nothing read here
    #      depends on a previous iteration -> safe with a "parallel" grid on megacore) ----
    col_z1 = jnp.zeros((rb + 4, 1, cin), pad1_ref.dtype)
    pad1_ref[:, 0:1, :] = col_z1
    pad1_ref[:, wp + 1:wp + 2, :] = col_z1
    col_z2 = jnp.zeros((rb + 2, 1, cmid), pad2_ref.dtype)
    pad2_ref[:, 0:1, :] = col_z2
    pad2_ref[:, wp + 1:wp + 2, :] = col_z2

    # ---- MaxPool2d(2) into pad1 (pooled rows r0-2 .. r0+RB+1) ----
    # interior RB rows: always inside the image
    pad1_ref[2:rb + 2, 1:wp + 1, :] = _pool2x2(
        x_ref[0, pl.ds(2 * r0, 2 * rb), :, :])

    # top halo (pooled rows r0-2, r0-1): zeros at the image top, real pooled rows otherwise
    @pl.when(hb == 0)
    def _():
        pad1_ref[0:2, :, :] = jnp.zeros((2, wp + 2, cin), pad1_ref.dtype)

    @pl.when(hb > 0)
    def _():
        pad1_ref[0:2, 1:wp + 1, :] = _pool2x2(
            x_ref[0, pl.ds(2 * r0 - 4, 4), :, :])

    # bottom halo (pooled rows r0+RB, r0+RB+1)
    @pl.when(hb == nhb - 1)
    def _():
        pad1_ref[rb + 2:rb + 4, :, :] = jnp.zeros((2, wp + 2, cin), pad1_ref.dtype)

    @pl.when(hb < nhb - 1)
    def _():
        pad1_ref[rb + 2:rb + 4, 1:wp + 1, :] = _pool2x2(
            x_ref[0, pl.ds(2 * (r0 + rb), 4), :, :])

    # ---- conv1 + ReLU over RB+2 rows (includes the 1-row halo conv2 needs) ----
    h1 = _conv3x3_relu(pad1_ref, w1_ref, b1_ref, rb + 2, wp)       # ((RB+2)*Wp, Cmid)
    pad2_ref[0:rb + 2, 1:wp + 1, :] = (
        h1.reshape(rb + 2, wp, cmid).astype(pad2_ref.dtype))

    # conv1 rows falling outside the image are conv2's zero padding (NOT relu(bias)):
    @pl.when(hb == 0)
    def _():
        pad2_ref[0:1, :, :] = jnp.zeros((1, wp + 2, cmid), pad2_ref.dtype)

    @pl.when(hb == nhb - 1)
    def _():
        pad2_ref[rb + 1:rb + 2, :, :] = jnp.zeros((1, wp + 2, cmid), pad2_ref.dtype)

    # ---- conv2 + ReLU over the RB output rows ----
    h2 = _conv3x3_relu(pad2_ref, w2_ref, b2_ref, rb, wp)           # (RB*Wp, Cout)
    o_ref[0] = h2.reshape(rb, wp, cout).astype(o_ref.dtype)


# ---------------------------------------------------------------------------
# Wrappers
# ---------------------------------------------------------------------------
def _pick_row_block(hp, target):
    """Largest divisor of hp in [2, target]; falls back to hp (single row block)."""
    target = max(2, min(target, hp))
    for rb in range(target, 1, -1):
        if hp % rb == 0:
            return rb
    return hp


def down_forward_nhwc(x_nhwc, params, *, block_rows=4):
    """Down.forward on NHWC activations (native layout for this kernel)."""
    n, h, w, cin = x_nhwc.shape
    assert h % 2 == 0 and w % 2 == 0, "MaxPool2d(2) kernel expects even H and W"
    hp, wp = h // 2, w // 2
    cmid = params["w1"].shape[-1]
    cout = params["w2"].shape[-1]
    rb = _pick_row_block(hp, block_rows)
    num_hb = hp // rb

    # HWIO -> (ky*kx*cin, cout) flattened, bf16 for the MXU; biases stay f32.
    w1 = params["w1"].reshape(9 * cin, cmid).astype(jnp.bfloat16)
    b1 = params["b1"].reshape(1, cmid).astype(jnp.float32)
    w2 = params["w2"].reshape(9 * cmid, cout).astype(jnp.bfloat16)
    b2 = params["b2"].reshape(1, cout).astype(jnp.float32)

    return pl.pallas_call(
        _down_kernel,
        out_shape=jax.ShapeDtypeStruct((n, hp, wp, cout), x_nhwc.dtype),
        grid=(n, num_hb),
        in_specs=[
            # Whole image per batch index; the block index is row-block invariant so
            # Pallas does not re-DMA it across the inner (row-block) grid axis.
            pl.BlockSpec((1, h, w, cin), lambda i, j: (i, 0, 0, 0)),
            pl.BlockSpec((9 * cin, cmid), lambda i, j: (0, 0)),
            pl.BlockSpec((1, cmid), lambda i, j: (0, 0)),
            pl.BlockSpec((9 * cmid, cout), lambda i, j: (0, 0)),
            pl.BlockSpec((1, cout), lambda i, j: (0, 0)),
        ],
        out_specs=pl.BlockSpec((1, rb, wp, cout), lambda i, j: (i, j, 0, 0)),
        scratch_shapes=[
            pltpu.VMEM((rb + 4, wp + 2, cin), jnp.float32),
            pltpu.VMEM((rb + 2, wp + 2, cmid), jnp.float32),
        ],
        compiler_params=pltpu.CompilerParams(
            dimension_semantics=("parallel", "parallel"),
            vmem_limit_bytes=32 * 1024 * 1024),
    )(x_nhwc, w1, b1, w2, b2)


@jax.jit
def down_forward(x_nchw, params):
    """PyTorch-parity entry point (NCHW in / NCHW out).

    In a full network keep activations NHWC end-to-end and call `down_forward_nhwc`
    directly; these two transposes are boundary layout plumbing only.
    """
    x = jnp.transpose(x_nchw, (0, 2, 3, 1))
    y = down_forward_nhwc(x, params)
    return jnp.transpose(y, (0, 3, 1, 2))


# ---------------------------------------------------------------------------
# Deterministic parameter init (mimics PyTorch Conv2d default uniform init)
# ---------------------------------------------------------------------------
def init_down_params(key, in_ch, out_ch):
    k1, k2, k3, k4 = jax.random.split(key, 4)
    bound1 = 1.0 / jnp.sqrt(in_ch * 9)
    bound2 = 1.0 / jnp.sqrt(out_ch * 9)
    return {
        "w1": jax.random.uniform(k1, (3, 3, in_ch, out_ch), jnp.float32,
                                 -bound1, bound1),
        "b1": jax.random.uniform(k2, (out_ch,), jnp.float32, -bound1, bound1),
        "w2": jax.random.uniform(k3, (3, 3, out_ch, out_ch), jnp.float32,
                                 -bound2, bound2),
        "b2": jax.random.uniform(k4, (out_ch,), jnp.float32, -bound2, bound2),
    }


# ---------------------------------------------------------------------------
# Pure-JAX reference (f32) for correctness check
# ---------------------------------------------------------------------------
def down_reference(x_nchw, params):
    x = jnp.transpose(x_nchw, (0, 2, 3, 1))
    x = jax.lax.reduce_window(x, -jnp.inf, jax.lax.max,
                              (1, 2, 2, 1), (1, 2, 2, 1), "VALID")

    def conv(x, w, b):
        y = jax.lax.conv_general_dilated(
            x, w, window_strides=(1, 1), padding="SAME",
            dimension_numbers=("NHWC", "HWIO", "NHWC"))
        return jax.nn.relu(y + b)

    x = conv(x, params["w1"], params["b1"])
    x = conv(x, params["w2"], params["b2"])
    return jnp.transpose(x, (0, 3, 1, 2))


if __name__ == "__main__":
    N, C_IN, C_OUT, H, W = 2, 4, 8, 16, 16

    key = jax.random.PRNGKey(0)
    kx, kp = jax.random.split(key)
    x = jax.random.normal(kx, (N, C_IN, H, W), jnp.float32)      # NCHW like PyTorch
    params = init_down_params(kp, C_IN, C_OUT)

    out = jax.block_until_ready(down_forward(x, params))
    ref = jax.block_until_ready(down_reference(x, params))

    assert out.shape == (N, C_OUT, H // 2, W // 2), out.shape
    # bf16 MXU operands with f32 accumulation -> compare against the pure-f32 reference
    # at bf16-level tolerance.
    max_err = float(jnp.max(jnp.abs(out - ref)))
    assert jnp.allclose(out, ref, atol=3e-2, rtol=3e-2), max_err

    print("KERNEL_OK")
</pallas_src>

<mosaic_0001>
module attributes {stable_mosaic.version = 11 : i64} {
  func.func @_down_kernel(%arg0: i32, %arg1: i32, %arg2: memref<1x16x16x4xf32, #tpu.memory_space<vmem>>, %arg3: memref<36x8xbf16, #tpu.memory_space<vmem>>, %arg4: memref<1x8xf32, #tpu.memory_space<vmem>>, %arg5: memref<72x8xbf16, #tpu.memory_space<vmem>>, %arg6: memref<1x8xf32, #tpu.memory_space<vmem>>, %arg7: memref<1x4x8x8xf32, #tpu.memory_space<vmem>>, %arg8: memref<8x10x4xf32, #tpu.memory_space<vmem>>, %arg9: memref<6x10x8xf32, #tpu.memory_space<vmem>>) attributes {dimension_semantics = [#tpu.dimension_semantics<parallel>, #tpu.dimension_semantics<parallel>], iteration_bounds = array<i64: 2, 2>, scalar_prefetch = 0 : i64, scratch_operands = 2 : i64, tpu.core_type = #tpu.core_type<tc>, window_params = [{transform_indices = @transform_0, window_bounds = array<i64: 1, 16, 16, 4>}, {pipeline_mode = #tpu.pipeline_mode<synchronous>, transform_indices = @transform_1, window_bounds = array<i64: 36, 8>}, {pipeline_mode = #tpu.pipeline_mode<synchronous>, transform_indices = @transform_2, window_bounds = array<i64: 1, 8>}, {pipeline_mode = #tpu.pipeline_mode<synchronous>, transform_indices = @transform_3, window_bounds = array<i64: 72, 8>}, {pipeline_mode = #tpu.pipeline_mode<synchronous>, transform_indices = @transform_4, window_bounds = array<i64: 1, 8>}, {transform_indices = @transform_5, window_bounds = array<i64: 1, 4, 8, 8>}]} {
    %c4_i32 = arith.constant 4 : i32
    %0 = arith.muli %arg1, %c4_i32 : i32
    %cst = arith.constant 0.000000e+00 : f32
    %1 = vector.broadcast %cst : f32 to vector<8x1x4xf32>
    %c0 = arith.constant 0 : index
    %c0_0 = arith.constant 0 : index
    %c0_1 = arith.constant 0 : index
    %2 = vector.load %arg8[%c0, %c0_0, %c0_1] : memref<8x10x4xf32, #tpu.memory_space<vmem>>, vector<8x1x4xf32>
    tpu.vector_store %arg8[%c0, %c0_0, %c0_1], %1 {strides = array<i32>} : memref<8x10x4xf32, #tpu.memory_space<vmem>>, vector<8x1x4xf32>,
    %c0_2 = arith.constant 0 : index
    %c9 = arith.constant 9 : index
    %c0_3 = arith.constant 0 : index
    %3 = vector.load %arg8[%c0_2, %c9, %c0_3] : memref<8x10x4xf32, #tpu.memory_space<vmem>>, vector<8x1x4xf32>
    tpu.vector_store %arg8[%c0_2, %c9, %c0_3], %1 {strides = array<i32>} : memref<8x10x4xf32, #tpu.memory_space<vmem>>, vector<8x1x4xf32>,
    %cst_4 = arith.constant 0.000000e+00 : f32
    %4 = vector.broadcast %cst_4 : f32 to vector<6x1x8xf32>
    %c0_5 = arith.constant 0 : index
    %c0_6 = arith.constant 0 : index
    %c0_7 = arith.constant 0 : index
    %5 = vector.load %arg9[%c0_5, %c0_6, %c0_7] : memref<6x10x8xf32, #tpu.memory_space<vmem>>, vector<6x1x8xf32>
    tpu.vector_store %arg9[%c0_5, %c0_6, %c0_7], %4 {strides = array<i32>} : memref<6x10x8xf32, #tpu.memory_space<vmem>>, vector<6x1x8xf32>,
    %c0_8 = arith.constant 0 : index
    %c9_9 = arith.constant 9 : index
    %c0_10 = arith.constant 0 : index
    %6 = vector.load %arg9[%c0_8, %c9_9, %c0_10] : memref<6x10x8xf32, #tpu.memory_space<vmem>>, vector<6x1x8xf32>
    tpu.vector_store %arg9[%c0_8, %c9_9, %c0_10], %4 {strides = array<i32>} : memref<6x10x8xf32, #tpu.memory_space<vmem>>, vector<6x1x8xf32>,
    %c2_i32 = arith.constant 2 : i32
    %7 = arith.muli %c2_i32, %0 : i32
    %c0_11 = arith.constant 0 : index
    %8 = arith.index_cast %7 : i32 to index
    %c0_12 = arith.constant 0 : index
    %c0_13 = arith.constant 0 : index
    %9 = vector.load %arg2[%c0_11, %8, %c0_12, %c0_13] : memref<1x16x16x4xf32, #tpu.memory_space<vmem>>, vector<1x8x16x4xf32>
    %10 = vector.shape_cast %9 : vector<1x8x16x4xf32> to vector<8x16x4xf32>
    %11 = vector.shape_cast %10 : vector<8x16x4xf32> to vector<4x2x16x4xf32>
    %12 = vector.extract_strided_slice %11 {offsets = [0, 0, 0, 0], sizes = [4, 1, 16, 4], strides = [1, 1, 1, 1]} : vector<4x2x16x4xf32> to vector<4x1x16x4xf32>
    %13 = vector.shape_cast %12 : vector<4x1x16x4xf32> to vector<4x16x4xf32>
    %14 = vector.extract_strided_slice %11 {offsets = [0, 1, 0, 0], sizes = [4, 1, 16, 4], strides = [1, 1, 1, 1]} : vector<4x2x16x4xf32> to vector<4x1x16x4xf32>
    %15 = vector.shape_cast %14 : vector<4x1x16x4xf32> to vector<4x16x4xf32>
    %16 = arith.maximumf %13, %15 : vector<4x16x4xf32>
    %17 = vector.shape_cast %16 : vector<4x16x4xf32> to vector<4x8x2x4xf32>
    %18 = vector.extract_strided_slice %17 {offsets = [0, 0, 0, 0], sizes = [4, 8, 1, 4], strides = [1, 1, 1, 1]} : vector<4x8x2x4xf32> to vector<4x8x1x4xf32>
    %19 = vector.shape_cast %18 : vector<4x8x1x4xf32> to vector<4x8x4xf32>
    %20 = vector.extract_strided_slice %17 {offsets = [0, 0, 1, 0], sizes = [4, 8, 1, 4], strides = [1, 1, 1, 1]} : vector<4x8x2x4xf32> to vector<4x8x1x4xf32>
    %21 = vector.shape_cast %20 : vector<4x8x1x4xf32> to vector<4x8x4xf32>
    %22 = arith.maximumf %19, %21 : vector<4x8x4xf32>
    %c2 = arith.constant 2 : index
    %c1 = arith.constant 1 : index
    %c0_14 = arith.constant 0 : index
    %23 = vector.load %arg8[%c2, %c1, %c0_14] : memref<8x10x4xf32, #tpu.memory_space<vmem>>, vector<4x8x4xf32>
    tpu.vector_store %arg8[%c2, %c1, %c0_14], %22 {strides = array<i32>} : memref<8x10x4xf32, #tpu.memory_space<vmem>>, vector<4x8x4xf32>,
    %c0_i32 = arith.constant 0 : i32
    %24 = arith.cmpi eq, %arg1, %c0_i32 : i32
    %25 = arith.extui %24 : i1 to i32
    %c0_i32_15 = arith.constant 0 : i32
    %26 = arith.cmpi ne, %25, %c0_i32_15 : i32
    scf.if %26 {
      %cst_98 = arith.constant 0.000000e+00 : f32
      %86 = vector.broadcast %cst_98 : f32 to vector<2x10x4xf32>
      %c0_99 = arith.constant 0 : index
      %c0_100 = arith.constant 0 : index
      %c0_101 = arith.constant 0 : index
      %87 = vector.load %arg8[%c0_99, %c0_100, %c0_101] : memref<8x10x4xf32, #tpu.memory_space<vmem>>, vector<2x10x4xf32>
      tpu.vector_store %arg8[%c0_99, %c0_100, %c0_101], %86 {strides = array<i32>} : memref<8x10x4xf32, #tpu.memory_space<vmem>>, vector<2x10x4xf32>,
    } else {
    }
    %c0_i32_16 = arith.constant 0 : i32
    %27 = arith.cmpi sgt, %arg1, %c0_i32_16 : i32
    %28 = arith.extui %27 : i1 to i32
    %c0_i32_17 = arith.constant 0 : i32
    %29 = arith.cmpi ne, %28, %c0_i32_17 : i32
    scf.if %29 {
      %c2_i32_98 = arith.constant 2 : i32
      %86 = arith.muli %c2_i32_98, %0 : i32
      %c4_i32_99 = arith.constant 4 : i32
      %87 = arith.subi %86, %c4_i32_99 : i32
      %c0_100 = arith.constant 0 : index
      %88 = arith.index_cast %87 : i32 to index
      %c0_101 = arith.constant 0 : index
      %c0_102 = arith.constant 0 : index
      %89 = vector.load %arg2[%c0_100, %88, %c0_101, %c0_102] : memref<1x16x16x4xf32, #tpu.memory_space<vmem>>, vector<1x4x16x4xf32>
      %90 = vector.shape_cast %89 : vector<1x4x16x4xf32> to vector<4x16x4xf32>
      %91 = vector.shape_cast %90 : vector<4x16x4xf32> to vector<2x2x16x4xf32>
      %92 = vector.extract_strided_slice %91 {offsets = [0, 0, 0, 0], sizes = [2, 1, 16, 4], strides = [1, 1, 1, 1]} : vector<2x2x16x4xf32> to vector<2x1x16x4xf32>
      %93 = vector.shape_cast %92 : vector<2x1x16x4xf32> to vector<2x16x4xf32>
      %94 = vector.extract_strided_slice %91 {offsets = [0, 1, 0, 0], sizes = [2, 1, 16, 4], strides = [1, 1, 1, 1]} : vector<2x2x16x4xf32> to vector<2x1x16x4xf32>
      %95 = vector.shape_cast %94 : vector<2x1x16x4xf32> to vector<2x16x4xf32>
      %96 = arith.maximumf %93, %95 : vector<2x16x4xf32>
      %97 = vector.shape_cast %96 : vector<2x16x4xf32> to vector<2x8x2x4xf32>
      %98 = vector.extract_strided_slice %97 {offsets = [0, 0, 0, 0], sizes = [2, 8, 1, 4], strides = [1, 1, 1, 1]} : vector<2x8x2x4xf32> to vector<2x8x1x4xf32>
      %99 = vector.shape_cast %98 : vector<2x8x1x4xf32> to vector<2x8x4xf32>
      %100 = vector.extract_strided_slice %97 {offsets = [0, 0, 1, 0], sizes = [2, 8, 1, 4], strides = [1, 1, 1, 1]} : vector<2x8x2x4xf32> to vector<2x8x1x4xf32>
      %101 = vector.shape_cast %100 : vector<2x8x1x4xf32> to vector<2x8x4xf32>
      %102 = arith.maximumf %99, %101 : vector<2x8x4xf32>
      %c0_103 = arith.constant 0 : index
      %c1_104 = arith.constant 1 : index
      %c0_105 = arith.constant 0 : index
      %103 = vector.load %arg8[%c0_103, %c1_104, %c0_105] : memref<8x10x4xf32, #tpu.memory_space<vmem>>, vector<2x8x4xf32>
      tpu.vector_store %arg8[%c0_103, %c1_104, %c0_105], %102 {strides = array<i32>} : memref<8x10x4xf32, #tpu.memory_space<vmem>>, vector<2x8x4xf32>,
    } else {
    }
    %c1_i32 = arith.constant 1 : i32
    %30 = arith.cmpi eq, %arg1, %c1_i32 : i32
    %31 = arith.extui %30 : i1 to i32
    %c0_i32_18 = arith.constant 0 : i32
    %32 = arith.cmpi ne, %31, %c0_i32_18 : i32
    scf.if %32 {
      %cst_98 = arith.constant 0.000000e+00 : f32
      %86 = vector.broadcast %cst_98 : f32 to vector<2x10x4xf32>
      %c6 = arith.constant 6 : index
      %c0_99 = arith.constant 0 : index
      %c0_100 = arith.constant 0 : index
      %87 = vector.load %arg8[%c6, %c0_99, %c0_100] : memref<8x10x4xf32, #tpu.memory_space<vmem>>, vector<2x10x4xf32>
      tpu.vector_store %arg8[%c6, %c0_99, %c0_100], %86 {strides = array<i32>} : memref<8x10x4xf32, #tpu.memory_space<vmem>>, vector<2x10x4xf32>,
    } else {
    }
    %c1_i32_19 = arith.constant 1 : i32
    %33 = arith.cmpi slt, %arg1, %c1_i32_19 : i32
    %34 = arith.extui %33 : i1 to i32
    %c0_i32_20 = arith.constant 0 : i32
    %35 = arith.cmpi ne, %34, %c0_i32_20 : i32
    scf.if %35 {
      %c4_i32_98 = arith.constant 4 : i32
      %86 = arith.addi %0, %c4_i32_98 : i32
      %c2_i32_99 = arith.constant 2 : i32
      %87 = arith.muli %c2_i32_99, %86 : i32
      %c0_100 = arith.constant 0 : index
      %88 = arith.index_cast %87 : i32 to index
      %c0_101 = arith.constant 0 : index
      %c0_102 = arith.constant 0 : index
      %89 = vector.load %arg2[%c0_100, %88, %c0_101, %c0_102] : memref<1x16x16x4xf32, #tpu.memory_space<vmem>>, vector<1x4x16x4xf32>
      %90 = vector.shape_cast %89 : vector<1x4x16x4xf32> to vector<4x16x4xf32>
      %91 = vector.shape_cast %90 : vector<4x16x4xf32> to vector<2x2x16x4xf32>
      %92 = vector.extract_strided_slice %91 {offsets = [0, 0, 0, 0], sizes = [2, 1, 16, 4], strides = [1, 1, 1, 1]} : vector<2x2x16x4xf32> to vector<2x1x16x4xf32>
      %93 = vector.shape_cast %92 : vector<2x1x16x4xf32> to vector<2x16x4xf32>
      %94 = vector.extract_strided_slice %91 {offsets = [0, 1, 0, 0], sizes = [2, 1, 16, 4], strides = [1, 1, 1, 1]} : vector<2x2x16x4xf32> to vector<2x1x16x4xf32>
      %95 = vector.shape_cast %94 : vector<2x1x16x4xf32> to vector<2x16x4xf32>
      %96 = arith.maximumf %93, %95 : vector<2x16x4xf32>
      %97 = vector.shape_cast %96 : vector<2x16x4xf32> to vector<2x8x2x4xf32>
      %98 = vector.extract_strided_slice %97 {offsets = [0, 0, 0, 0], sizes = [2, 8, 1, 4], strides = [1, 1, 1, 1]} : vector<2x8x2x4xf32> to vector<2x8x1x4xf32>
      %99 = vector.shape_cast %98 : vector<2x8x1x4xf32> to vector<2x8x4xf32>
      %100 = vector.extract_strided_slice %97 {offsets = [0, 0, 1, 0], sizes = [2, 8, 1, 4], strides = [1, 1, 1, 1]} : vector<2x8x2x4xf32> to vector<2x8x1x4xf32>
      %101 = vector.shape_cast %100 : vector<2x8x1x4xf32> to vector<2x8x4xf32>
      %102 = arith.maximumf %99, %101 : vector<2x8x4xf32>
      %c6 = arith.constant 6 : index
      %c1_103 = arith.constant 1 : index
      %c0_104 = arith.constant 0 : index
      %103 = vector.load %arg8[%c6, %c1_103, %c0_104] : memref<8x10x4xf32, #tpu.memory_space<vmem>>, vector<2x8x4xf32>
      tpu.vector_store %arg8[%c6, %c1_103, %c0_104], %102 {strides = array<i32>} : memref<8x10x4xf32, #tpu.memory_space<vmem>>, vector<2x8x4xf32>,
    } else {
    }
    %c0_21 = arith.constant 0 : index
    %c0_22 = arith.constant 0 : index
    %c0_23 = arith.constant 0 : index
    %36 = vector.load %arg8[%c0_21, %c0_22, %c0_23] : memref<8x10x4xf32, #tpu.memory_space<vmem>>, vector<6x8x4xf32>
    %c0_24 = arith.constant 0 : index
    %c1_25 = arith.constant 1 : index
    %c0_26 = arith.constant 0 : index
    %37 = vector.load %arg8[%c0_24, %c1_25, %c0_26] : memref<8x10x4xf32, #tpu.memory_space<vmem>>, vector<6x8x4xf32>
    %c0_27 = arith.constant 0 : index
    %c2_28 = arith.constant 2 : index
    %c0_29 = arith.constant 0 : index
    %38 = vector.load %arg8[%c0_27, %c2_28, %c0_29] : memref<8x10x4xf32, #tpu.memory_space<vmem>>, vector<6x8x4xf32>
    %c1_30 = arith.constant 1 : index
    %c0_31 = arith.constant 0 : index
    %c0_32 = arith.constant 0 : index
    %39 = vector.load %arg8[%c1_30, %c0_31, %c0_32] : memref<8x10x4xf32, #tpu.memory_space<vmem>>, vector<6x8x4xf32>
    %c1_33 = arith.constant 1 : index
    %c1_34 = arith.constant 1 : index
    %c0_35 = arith.constant 0 : index
    %40 = vector.load %arg8[%c1_33, %c1_34, %c0_35] : memref<8x10x4xf32, #tpu.memory_space<vmem>>, vector<6x8x4xf32>
    %c1_36 = arith.constant 1 : index
    %c2_37 = arith.constant 2 : index
    %c0_38 = arith.constant 0 : index
    %41 = vector.load %arg8[%c1_36, %c2_37, %c0_38] : memref<8x10x4xf32, #tpu.memory_space<vmem>>, vector<6x8x4xf32>
    %c2_39 = arith.constant 2 : index
    %c0_40 = arith.constant 0 : index
    %c0_41 = arith.constant 0 : index
    %42 = vector.load %arg8[%c2_39, %c0_40, %c0_41] : memref<8x10x4xf32, #tpu.memory_space<vmem>>, vector<6x8x4xf32>
    %c2_42 = arith.constant 2 : index
    %c1_43 = arith.constant 1 : index
    %c0_44 = arith.constant 0 : index
    %43 = vector.load %arg8[%c2_42, %c1_43, %c0_44] : memref<8x10x4xf32, #tpu.memory_space<vmem>>, vector<6x8x4xf32>
    %c2_45 = arith.constant 2 : index
    %c2_46 = arith.constant 2 : index
    %c0_47 = arith.constant 0 : index
    %44 = vector.load %arg8[%c2_45, %c2_46, %c0_47] : memref<8x10x4xf32, #tpu.memory_space<vmem>>, vector<6x8x4xf32>
    %45 = tpu.concatenate %36, %37, %38, %39, %40, %41, %42, %43, %44 in 2 : vector<6x8x4xf32>, vector<6x8x4xf32>, vector<6x8x4xf32>, vector<6x8x4xf32>, vector<6x8x4xf32>, vector<6x8x4xf32>, vector<6x8x4xf32>, vector<6x8x4xf32>, vector<6x8x4xf32> -> vector<6x8x36xf32>
    %46 = vector.shape_cast %45 : vector<6x8x36xf32> to vector<48x36xf32>
    %47 = arith.truncf %46 : vector<48x36xf32> to vector<48x36xbf16>
    %c0_48 = arith.constant 0 : index
    %c0_49 = arith.constant 0 : index
    %48 = vector.load %arg3[%c0_48, %c0_49] : memref<36x8xbf16, #tpu.memory_space<vmem>>, vector<36x8xbf16>
    %cst_50 = arith.constant dense<0.000000e+00> : vector<48x8xf32>
    %49 = tpu.matmul %47, %48, %cst_50 {dimension_numbers = #tpu.dot_dimension_numbers<[1], [0], [0], [1], [0, 0, 1, 1], [], []>} : vector<48x36xbf16>, vector<36x8xbf16>, vector<48x8xf32> -> vector<48x8xf32>
    %c0_51 = arith.constant 0 : index
    %c0_52 = arith.constant 0 : index
    %50 = vector.load %arg4[%c0_51, %c0_52] : memref<1x8xf32, #tpu.memory_space<vmem>>, vector<1x8xf32>
    %51 = vector.broadcast %50 : vector<1x8xf32> to vector<48x8xf32>
    %52 = arith.addf %49, %51 : vector<48x8xf32>
    %cst_53 = arith.constant 0.000000e+00 : f32
    %53 = vector.broadcast %cst_53 : f32 to vector<48x8xf32>
    %54 = arith.maximumf %52, %53 : vector<48x8xf32>
    %55 = vector.shape_cast %54 : vector<48x8xf32> to vector<6x8x8xf32>
    %c0_54 = arith.constant 0 : index
    %c1_55 = arith.constant 1 : index
    %c0_56 = arith.constant 0 : index
    %56 = vector.load %arg9[%c0_54, %c1_55, %c0_56] : memref<6x10x8xf32, #tpu.memory_space<vmem>>, vector<6x8x8xf32>
    tpu.vector_store %arg9[%c0_54, %c1_55, %c0_56], %55 {strides = array<i32>} : memref<6x10x8xf32, #tpu.memory_space<vmem>>, vector<6x8x8xf32>,
    %c0_i32_57 = arith.constant 0 : i32
    %57 = arith.cmpi eq, %arg1, %c0_i32_57 : i32
    %58 = arith.extui %57 : i1 to i32
    %c0_i32_58 = arith.constant 0 : i32
    %59 = arith.cmpi ne, %58, %c0_i32_58 : i32
    scf.if %59 {
      %cst_98 = arith.constant 0.000000e+00 : f32
      %86 = vector.broadcast %cst_98 : f32 to vector<1x10x8xf32>
      %c0_99 = arith.constant 0 : index
      %c0_100 = arith.constant 0 : index
      %c0_101 = arith.constant 0 : index
      %87 = vector.load %arg9[%c0_99, %c0_100, %c0_101] : memref<6x10x8xf32, #tpu.memory_space<vmem>>, vector<1x10x8xf32>
      tpu.vector_store %arg9[%c0_99, %c0_100, %c0_101], %86 {strides = array<i32>} : memref<6x10x8xf32, #tpu.memory_space<vmem>>, vector<1x10x8xf32>,
    } else {
    }
    %c1_i32_59 = arith.constant 1 : i32
    %60 = arith.cmpi eq, %arg1, %c1_i32_59 : i32
    %61 = arith.extui %60 : i1 to i32
    %c0_i32_60 = arith.constant 0 : i32
    %62 = arith.cmpi ne, %61, %c0_i32_60 : i32
    scf.if %62 {
      %cst_98 = arith.constant 0.000000e+00 : f32
      %86 = vector.broadcast %cst_98 : f32 to vector<1x10x8xf32>
      %c5 = arith.constant 5 : index
      %c0_99 = arith.constant 0 : index
      %c0_100 = arith.constant 0 : index
      %87 = vector.load %arg9[%c5, %c0_99, %c0_100] : memref<6x10x8xf32, #tpu.memory_space<vmem>>, vector<1x10x8xf32>
      tpu.vector_store %arg9[%c5, %c0_99, %c0_100], %86 {strides = array<i32>} : memref<6x10x8xf32, #tpu.memory_space<vmem>>, vector<1x10x8xf32>,
    } else {
    }
    %c0_61 = arith.constant 0 : index
    %c0_62 = arith.constant 0 : index
    %c0_63 = arith.constant 0 : index
    %63 = vector.load %arg9[%c0_61, %c0_62, %c0_63] : memref<6x10x8xf32, #tpu.memory_space<vmem>>, vector<4x8x8xf32>
    %c0_64 = arith.constant 0 : index
    %c1_65 = arith.constant 1 : index
    %c0_66 = arith.constant 0 : index
    %64 = vector.load %arg9[%c0_64, %c1_65, %c0_66] : memref<6x10x8xf32, #tpu.memory_space<vmem>>, vector<4x8x8xf32>
    %c0_67 = arith.constant 0 : index
    %c2_68 = arith.constant 2 : index
    %c0_69 = arith.constant 0 : index
    %65 = vector.load %arg9[%c0_67, %c2_68, %c0_69] : memref<6x10x8xf32, #tpu.memory_space<vmem>>, vector<4x8x8xf32>
    %c1_70 = arith.constant 1 : index
    %c0_71 = arith.constant 0 : index
    %c0_72 = arith.constant 0 : index
    %66 = vector.load %arg9[%c1_70, %c0_71, %c0_72] : memref<6x10x8xf32, #tpu.memory_space<vmem>>, vector<4x8x8xf32>
    %c1_73 = arith.constant 1 : index
    %c1_74 = arith.constant 1 : index
    %c0_75 = arith.constant 0 : index
    %67 = vector.load %arg9[%c1_73, %c1_74, %c0_75] : memref<6x10x8xf32, #tpu.memory_space<vmem>>, vector<4x8x8xf32>
    %c1_76 = arith.constant 1 : index
    %c2_77 = arith.constant 2 : index
    %c0_78 = arith.constant 0 : index
    %68 = vector.load %arg9[%c1_76, %c2_77, %c0_78] : memref<6x10x8xf32, #tpu.memory_space<vmem>>, vector<4x8x8xf32>
    %c2_79 = arith.constant 2 : index
    %c0_80 = arith.constant 0 : index
    %c0_81 = arith.constant 0 : index
    %69 = vector.load %arg9[%c2_79, %c0_80, %c0_81] : memref<6x10x8xf32, #tpu.memory_space<vmem>>, vector<4x8x8xf32>
    %c2_82 = arith.constant 2 : index
    %c1_83 = arith.constant 1 : index
    %c0_84 = arith.constant 0 : index
    %70 = vector.load %arg9[%c2_82, %c1_83, %c0_84] : memref<6x10x8xf32, #tpu.memory_space<vmem>>, vector<4x8x8xf32>
    %c2_85 = arith.constant 2 : index
    %c2_86 = arith.constant 2 : index
    %c0_87 = arith.constant 0 : index
    %71 = vector.load %arg9[%c2_85, %c2_86, %c0_87] : memref<6x10x8xf32, #tpu.memory_space<vmem>>, vector<4x8x8xf32>
    %72 = tpu.concatenate %63, %64, %65, %66, %67, %68, %69, %70, %71 in 2 : vector<4x8x8xf32>, vector<4x8x8xf32>, vector<4x8x8xf32>, vector<4x8x8xf32>, vector<4x8x8xf32>, vector<4x8x8xf32>, vector<4x8x8xf32>, vector<4x8x8xf32>, vector<4x8x8xf32> -> vector<4x8x72xf32>
    %73 = vector.shape_cast %72 : vector<4x8x72xf32> to vector<32x72xf32>
    %74 = arith.truncf %73 : vector<32x72xf32> to vector<32x72xbf16>
    %c0_88 = arith.constant 0 : index
    %c0_89 = arith.constant 0 : index
    %75 = vector.load %arg5[%c0_88, %c0_89] : memref<72x8xbf16, #tpu.memory_space<vmem>>, vector<72x8xbf16>
    %cst_90 = arith.constant dense<0.000000e+00> : vector<32x8xf32>
    %76 = tpu.matmul %74, %75, %cst_90 {dimension_numbers = #tpu.dot_dimension_numbers<[1], [0], [0], [1], [0, 0, 1, 1], [], []>} : vector<32x72xbf16>, vector<72x8xbf16>, vector<32x8xf32> -> vector<32x8xf32>
    %c0_91 = arith.constant 0 : index
    %c0_92 = arith.constant 0 : index
    %77 = vector.load %arg6[%c0_91, %c0_92] : memref<1x8xf32, #tpu.memory_space<vmem>>, vector<1x8xf32>
    %78 = vector.broadcast %77 : vector<1x8xf32> to vector<32x8xf32>
    %79 = arith.addf %76, %78 : vector<32x8xf32>
    %cst_93 = arith.constant 0.000000e+00 : f32
    %80 = vector.broadcast %cst_93 : f32 to vector<32x8xf32>
    %81 = arith.maximumf %79, %80 : vector<32x8xf32>
    %82 = vector.shape_cast %81 : vector<32x8xf32> to vector<4x8x8xf32>
    %c0_94 = arith.constant 0 : index
    %c0_95 = arith.constant 0 : index
    %c0_96 = arith.constant 0 : index
    %c0_97 = arith.constant 0 : index
    %83 = vector.load %arg7[%c0_94, %c0_95, %c0_96, %c0_97] : memref<1x4x8x8xf32, #tpu.memory_space<vmem>>, vector<1x4x8x8xf32>
    %84 = vector.shape_cast %83 : vector<1x4x8x8xf32> to vector<4x8x8xf32>
    %85 = vector.shape_cast %82 : vector<4x8x8xf32> to vector<1x4x8x8xf32>
    tpu.vector_store %arg7[%c0_94, %c0_95, %c0_96, %c0_97], %85 {strides = array<i32>} : memref<1x4x8x8xf32, #tpu.memory_space<vmem>>, vector<1x4x8x8xf32>,
    return
  }
  func.func @transform_0(%arg0: i32, %arg1: i32) -> (i32, i32, i32, i32) {
    %c0_i32 = arith.constant 0 : i32
    %c0_i32_0 = arith.constant 0 : i32
    %c0_i32_1 = arith.constant 0 : i32
    %c0_i32_2 = arith.constant 0 : i32
    return %arg0, %c0_i32, %c0_i32_0, %c0_i32_1 : i32, i32, i32, i32
  }
  func.func @transform_1(%arg0: i32, %arg1: i32) -> (i32, i32) {
    %c0_i32 = arith.constant 0 : i32
    %c0_i32_0 = arith.constant 0 : i32
    %c0_i32_1 = arith.constant 0 : i32
    return %c0_i32, %c0_i32_0 : i32, i32
  }
  func.func @transform_2(%arg0: i32, %arg1: i32) -> (i32, i32) {
    %c0_i32 = arith.constant 0 : i32
    %c0_i32_0 = arith.constant 0 : i32
    %c0_i32_1 = arith.constant 0 : i32
    return %c0_i32, %c0_i32_0 : i32, i32
  }
  func.func @transform_3(%arg0: i32, %arg1: i32) -> (i32, i32) {
    %c0_i32 = arith.constant 0 : i32
    %c0_i32_0 = arith.constant 0 : i32
    %c0_i32_1 = arith.constant 0 : i32
    return %c0_i32, %c0_i32_0 : i32, i32
  }
  func.func @transform_4(%arg0: i32, %arg1: i32) -> (i32, i32) {
    %c0_i32 = arith.constant 0 : i32
    %c0_i32_0 = arith.constant 0 : i32
    %c0_i32_1 = arith.constant 0 : i32
    return %c0_i32, %c0_i32_0 : i32, i32
  }
  func.func @transform_5(%arg0: i32, %arg1: i32) -> (i32, i32, i32, i32) {
    %c0_i32 = arith.constant 0 : i32
    %c0_i32_0 = arith.constant 0 : i32
    %c0_i32_1 = arith.constant 0 : i32
    return %arg0, %arg1, %c0_i32, %c0_i32_0 : i32, i32, i32, i32
  }
}

</mosaic_0001>

<llo_original>
// kernel: down_forward.1
$region0: #{down_forward.1}
  #allocation0 [shape = 'u32[]', space=smem, size = 0x4, offset = 0x4, fixed_abs, tag = 'smem constant byte address 0x4 - core index']
  #allocation1 [shape = 'u32[144,128]{1,0:T(1,128)}', space=vmem, size = 0x12000, scoped, tag = 'internal scratch']
  #allocation2 [shape = 'f32[8,10,4]{2,1,0:T(8,128)}', space=vmem, size = 0x10000, scoped, tag = 'scratch operand']
  #allocation3 [shape = 'f32[6,10,8]{2,1,0:T(8,128)}', space=vmem, size = 0xc000, scoped, tag = 'scratch operand']
  %s0 = inlined_call_operand.vmem [shape: f32[2,16,16,4], index: 0, kind: input, shape index: {}]
  %s1 = inlined_call_operand.vmem [shape: bf16[36,8], index: 1, kind: input, shape index: {}]
  %s2 = inlined_call_operand.vmem [shape: f32[1,8], index: 2, kind: input, shape index: {}]
  %s3 = inlined_call_operand.vmem [shape: bf16[72,8], index: 3, kind: input, shape index: {}]
  %s4 = inlined_call_operand.vmem [shape: f32[1,8], index: 4, kind: input, shape index: {}]
  %s5 = inlined_call_operand.vmem [shape: f32[2,8,8,8], index: 5, kind: output, shape index: {}]
  %s6 = sld [smem:[#allocation0]]
  $region77: #{down_forward.1} parent=0
    _
  %s8 = ssub.s32 1, %s6
  %s9 = scalar_select 0, %s8, %s6
  loop: start=0, step=1, limit=6
  $region2: #{down_forward.1} parent=0 // loop_pre_header
    _
  $region3: #{down_forward.1} parent=0 // loop_header
    %s11 = sphi 0, %s15
    %p12 = scmp.ge.s32.totalorder %s11, 6
    %s18 = sphi 0, %s30
    %s19 = sphi 0, %s26
    %s20 = sphi 0, %s18
    %s21 = sphi 0, %s19
    %s22 = sphi 0, %s20
    %s23 = sphi 0, %s21
    %s33 = sphi 0, %s35
    %s36 = sphi 0, %s33
    %s37 = sphi 0, %s36
    %s53 = sphi 0, %s37
    %s57 = sphi 0, %s57
    %s59 = sphi 0, %s57
    %s60 = sphi 0, %s59
    %s74 = sphi 0, %s60
    %s78 = sphi 0, %s78
    %s80 = sphi 0, %s78
    %s81 = sphi 0, %s80
    %s95 = sphi 0, %s81
    %s99 = sphi 0, %s99
    %s101 = sphi 0, %s99
    %s102 = sphi 0, %s101
    %s116 = sphi 0, %s102
    %s120 = sphi 0, %s120
    %s122 = sphi 0, %s120
    %s123 = sphi 0, %s122
    %s137 = sphi 0, %s123
    %s145 = sphi 0, %s147
    %s148 = sphi 0, %s145
    %s149 = sphi 0, %s148
    %s165 = sphi 0, %s149
  $region4: #{down_forward.1} parent=0 // loop_header_branch
    %14 = sbr.rel (%p12) target = $region8
  $region5: #{down_forward.1} parent=0 // loop_body
    %s16 = ssub.s32 %s11, 1
    %s17 = ssub.s32 %s11, 2
    %s24 = sadd.s32 1, %s19
    %p25 = scmp.ge.s32.totalorder %s24, 2
    %s26 = scalar_select %p25, 0, %s24
    %s27 = sadd.s32 1, %s18
    %s28 = scalar_select %p25, %s27, %s18
    %p29 = scmp.ge.s32.totalorder %s28, 2
    %s30 = scalar_select %p29, 0, %s28
    %s31 = ssub.s32 %s18, %s30
    %p32 = scmp.eq.s32.totalorder %s31, 0
    %s34 = sadd.s32 %s33, 1
    %s35 = scalar_select %p32, %s33, %s34
    %p38 = pneg %p32
    %p39 = scmp.eq.s32.totalorder %s11, 3
    %p40 = por %p38, %p39
    %p41 = scmp.ne.s32.totalorder %s33, %s36
    %p42 = scmp.eq.s32.totalorder %s11, 0
    %p43 = por %p41, %p42
    %p44 = scmp.ne.s32.totalorder %s33, %s36
    %p45 = scmp.eq.s32.totalorder %s16, 3
    %p46 = por %p44, %p45
    %p47 = scmp.ne.s32.totalorder %s36, %s37
    %p48 = scmp.eq.s32.totalorder %s16, 0
    %p49 = por %p47, %p48
    %p50 = scmp.ne.s32.totalorder %s36, %s37
    %p51 = scmp.eq.s32.totalorder %s17, 3
    %p52 = por %p50, %p51
    %p54 = scmp.ne.s32.totalorder %s37, %s53
    %p55 = scmp.eq.s32.totalorder %s17, 0
    %p56 = por %p54, %p55
    %s58 = sadd.s32 %s57, 1
    %p61 = scmp.eq.s32.totalorder %s11, 3
    %p62 = scmp.ne.s32.totalorder %s57, %s59
    %p63 = scmp.eq.s32.totalorder %s11, 0
    %p64 = por %p62, %p63
    %p65 = scmp.ne.s32.totalorder %s57, %s59
    %p66 = scmp.eq.s32.totalorder %s16, 3
    %p67 = por %p65, %p66
    %p68 = scmp.ne.s32.totalorder %s59, %s60
    %p69 = scmp.eq.s32.totalorder %s16, 0
    %p70 = por %p68, %p69
    %p71 = scmp.ne.s32.totalorder %s59, %s60
    %p72 = scmp.eq.s32.totalorder %s17, 3
    %p73 = por %p71, %p72
    %p75 = scmp.ne.s32.totalorder %s60, %s74
    %p76 = scmp.eq.s32.totalorder %s17, 0
    %p77 = por %p75, %p76
    %s79 = sadd.s32 %s78, 1
    %p82 = scmp.eq.s32.totalorder %s11, 3
    %p83 = scmp.ne.s32.totalorder %s78, %s80
    %p84 = scmp.eq.s32.totalorder %s11, 0
    %p85 = por %p83, %p84
    %p86 = scmp.ne.s32.totalorder %s78, %s80
    %p87 = scmp.eq.s32.totalorder %s16, 3
    %p88 = por %p86, %p87
    %p89 = scmp.ne.s32.totalorder %s80, %s81
    %p90 = scmp.eq.s32.totalorder %s16, 0
    %p91 = por %p89, %p90
    %p92 = scmp.ne.s32.totalorder %s80, %s81
    %p93 = scmp.eq.s32.totalorder %s17, 3
    %p94 = por %p92, %p93
    %p96 = scmp.ne.s32.totalorder %s81, %s95
    %p97 = scmp.eq.s32.totalorder %s17, 0
    %p98 = por %p96, %p97
    %s100 = sadd.s32 %s99, 1
    %p103 = scmp.eq.s32.totalorder %s11, 3
    %p104 = scmp.ne.s32.totalorder %s99, %s101
    %p105 = scmp.eq.s32.totalorder %s11, 0
    %p106 = por %p104, %p105
    %p107 = scmp.ne.s32.totalorder %s99, %s101
    %p108 = scmp.eq.s32.totalorder %s16, 3
    %p109 = por %p107, %p108
    %p110 = scmp.ne.s32.totalorder %s101, %s102
    %p111 = scmp.eq.s32.totalorder %s16, 0
    %p112 = por %p110, %p111
    %p113 = scmp.ne.s32.totalorder %s101, %s102
    %p114 = scmp.eq.s32.totalorder %s17, 3
    %p115 = por %p113, %p114
    %p117 = scmp.ne.s32.totalorder %s102, %s116
    %p118 = scmp.eq.s32.totalorder %s17, 0
    %p119 = por %p117, %p118
    %s121 = sadd.s32 %s120, 1
    %p124 = scmp.eq.s32.totalorder %s11, 3
    %p125 = scmp.ne.s32.totalorder %s120, %s122
    %p126 = scmp.eq.s32.totalorder %s11, 0
    %p127 = por %p125, %p126
    %p128 = scmp.ne.s32.totalorder %s120, %s122
    %p129 = scmp.eq.s32.totalorder %s16, 3
    %p130 = por %p128, %p129
    %p131 = scmp.ne.s32.totalorder %s122, %s123
    %p132 = scmp.eq.s32.totalorder %s16, 0
    %p133 = por %p131, %p132
    %p134 = scmp.ne.s32.totalorder %s122, %s123
    %p135 = scmp.eq.s32.totalorder %s17, 3
    %p136 = por %p134, %p135
    %p138 = scmp.ne.s32.totalorder %s123, %s137
    %p139 = scmp.eq.s32.totalorder %s17, 0
    %p140 = por %p138, %p139
    %s141 = ssub.s32 %s18, %s30
    %s142 = ssub.s32 %s19, %s26
    %s143 = sor.u32 %s141, %s142
    %p144 = scmp.eq.s32.totalorder %s143, 0
    %s146 = sadd.s32 %s145, 1
    %s147 = scalar_select %p144, %s145, %s146
    %p150 = pneg %p144
    %p151 = scmp.eq.s32.totalorder %s11, 3
    %p152 = por %p150, %p151
    %p153 = scmp.ne.s32.totalorder %s145, %s148
    %p154 = scmp.eq.s32.totalorder %s11, 0
    %p155 = por %p153, %p154
    %p156 = scmp.ne.s32.totalorder %s145, %s148
    %p157 = scmp.eq.s32.totalorder %s16, 3
    %p158 = por %p156, %p157
    %p159 = scmp.ne.s32.totalorder %s148, %s149
    %p160 = scmp.eq.s32.totalorder %s16, 0
    %p161 = por %p159, %p160
    %p162 = scmp.ne.s32.totalorder %s148, %s149
    %p163 = scmp.eq.s32.totalorder %s17, 3
    %p164 = por %p162, %p163
    %p166 = scmp.ne.s32.totalorder %s149, %s165
    %p167 = scmp.eq.s32.totalorder %s17, 0
    %p168 = por %p166, %p167
    %p169 = scmp.le.s32.totalorder 1, %s11
    %p170 = scmp.lt.s32.totalorder %s11, 5
    %p171 = pnand %p169, %p170
    %p172 = pneg %p171
    // Predicated region
    $region9: #{down_forward.1} parent=5 // pred_check
      _
    $region10: #{down_forward.1} parent=5 // pred_check_branch
      %174 = sbr.rel (%p171) target = $region12
    $region11: #{down_forward.1} parent=5 // pred_region
      %s175 = ssub.s32 %s11, 1
      // Predicated region
      $region13: #{down_forward.1} parent=11 // pred_check
        %p176 = pneg %p70
      $region14: #{down_forward.1} parent=11 // pred_check_branch
        %178 = sbr.rel (%p176) target = $region16
      $region15: #{down_forward.1} parent=11 // pred_region
        _
      $region16: #{down_forward.1} parent=11 // pred_fallthru
        _
      // Predicated region
      $region17: #{down_forward.1} parent=11 // pred_check
        %p179 = pneg %p91
      $region18: #{down_forward.1} parent=11 // pred_check_branch
        %181 = sbr.rel (%p179) target = $region20
      $region19: #{down_forward.1} parent=11 // pred_region
        _
      $region20: #{down_forward.1} parent=11 // pred_fallthru
        _
      // Predicated region
      $region21: #{down_forward.1} parent=11 // pred_check
        %p182 = pneg %p112
      $region22: #{down_forward.1} parent=11 // pred_check_branch
        %184 = sbr.rel (%p182) target = $region24
      $region23: #{down_forward.1} parent=11 // pred_region
        _
      $region24: #{down_forward.1} parent=11 // pred_fallthru
        _
      // Predicated region
      $region25: #{down_forward.1} parent=11 // pred_check
        %p185 = pneg %p133
      $region26: #{down_forward.1} parent=11 // pred_check_branch
        %187 = sbr.rel (%p185) target = $region28
      $region27: #{down_forward.1} parent=11 // pred_region
        _
      $region28: #{down_forward.1} parent=11 // pred_fallthru
        _
    $region12: #{down_forward.1} parent=5 // pred_fallthru
      _
    %p188 = scmp.lt.s32.totalorder %s11, 4
    // Predicated region
    $region29: #{down_forward.1} parent=5 // pred_check
      %p189 = pneg %p188
    $region30: #{down_forward.1} parent=5 // pred_check_branch
      %191 = sbr.rel (%p189) target = $region32
    $region31: #{down_forward.1} parent=5 // pred_region
      // Predicated region
      $region33: #{down_forward.1} parent=31 // pred_check
        %p192 = pneg %p43
      $region34: #{down_forward.1} parent=31 // pred_check_branch
        %194 = sbr.rel (%p192) target = $region36
      $region35: #{down_forward.1} parent=31 // pred_region
        %p195 = scmp.lt.s32.totalorder %s18, 1
        %s196 = scalar_select %p195, %s18, 1
        %s197 = smul.addr %s196, 32
        %s198 = smul.addr %s197, 8
        %s199 = scalar_lea.vmem %s0, %s198
      $region36: #{down_forward.1} parent=31 // pred_fallthru
        _
    $region32: #{down_forward.1} parent=5 // pred_fallthru
      _
    %p200 = scmp.le.s32.totalorder 1, %s11
    %p201 = scmp.lt.s32.totalorder %s11, 5
    %p202 = pnand %p200, %p201
    %p203 = pneg %p202
    // Predicated region
    $region37: #{down_forward.1} parent=5 // pred_check
      _
    $region38: #{down_forward.1} parent=5 // pred_check_branch
      %205 = sbr.rel (%p202) target = $region40
    $region39: #{down_forward.1} parent=5 // pred_region
      %s206 = ssub.s32 %s11, 1
      %p207 = scmp.lt.s32.totalorder %s20, 1
      %s208 = scalar_select %p207, %s20, 1
      %s209 = smul.addr %s208, 32
      %s210 = smul.addr %s209, 8
      %s211 = scalar_lea.vmem %s0, %s210
      %p212 = pneg %p49
      %p213 = pneg %p46
      %p214 = pneg %p70
      %p215 = pneg %p67
      %p216 = pneg %p91
      %p217 = pneg %p88
      %p218 = pneg %p112
      %p219 = pneg %p109
      %p220 = pneg %p133
      %p221 = pneg %p130
      %p222 = pneg %p161
      %p223 = pneg %p158
      %s224 = smul.u32 4, %s21
      %p225 = scmp.lt.s32.totalorder %s20, 1
      %s226 = scalar_select %p225, %s20, 1
      %p227 = scmp.lt.s32.totalorder %s224, 7
      %s228 = scalar_select %p227, %s224, 7
      %s229 = smul.addr %s226, 8
      %s230 = sadd.s32 %s228, %s229
      %s231 = smul.addr %s230, 8
      %s232 = scalar_lea.vmem %s5, %s231
      %p233 = scmp.lt.s32.totalorder %s20, 1
      %s234 = scalar_select %p233, %s20, 1
      %s235 = smul.addr %s234, 32
      %s236 = smul.addr %s235, 8
      %s237 = scalar_lea.vmem %s0, %s236
      %s238 = smul.u32 4, %s21
      %p239 = scmp.lt.s32.totalorder %s20, 1
      %s240 = scalar_select %p239, %s20, 1
      %p241 = scmp.lt.s32.totalorder %s238, 7
      %s242 = scalar_select %p241, %s238, 7
      %s243 = smul.addr %s240, 8
      %s244 = sadd.s32 %s242, %s243
      %s245 = smul.addr %s244, 8
      %s246 = scalar_lea.vmem %s5, %s245
      %s247 = smul.u32 4, %s21
      %s249 = smul.u32 %s21, 4
      %vm250 = vcmask 24576
      %251 = vst.msk [vmem:[#allocation2] sm:$0x1] %vm250, 0.0
      %252 = vst.msk [vmem:[#allocation2 + $0x10] sm:$0x1] %vm250, 0.0
      %253 = vst.msk [vmem:[#allocation2 + $0x20] sm:$0x1] %vm250, 0.0
      %254 = vst.msk [vmem:[#allocation2 + $0x30] sm:$0x1] %vm250, 0.0
      %255 = vst.msk [vmem:[#allocation2 + $0x40] sm:$0x1] %vm250, 0.0
      %256 = vst.msk [vmem:[#allocation2 + $0x50] sm:$0x1] %vm250, 0.0
      %257 = vst.msk [vmem:[#allocation2 + $0x60] sm:$0x1] %vm250, 0.0
      %258 = vst.msk [vmem:[#allocation2 + $0x70] sm:$0x1] %vm250, 0.0
      %259 = vst.msk [vmem:[#allocation2 + $0x9] sm:$0x1] %vm250, 0.0
      %260 = vst.msk [vmem:[#allocation2 + $0x19] sm:$0x1] %vm250, 0.0
      %261 = vst.msk [vmem:[#allocation2 + $0x29] sm:$0x1] %vm250, 0.0
      %262 = vst.msk [vmem:[#allocation2 + $0x39] sm:$0x1] %vm250, 0.0
      %263 = vst.msk [vmem:[#allocation2 + $0x49] sm:$0x1] %vm250, 0.0
      %264 = vst.msk [vmem:[#allocation2 + $0x59] sm:$0x1] %vm250, 0.0
      %265 = vst.msk [vmem:[#allocation2 + $0x69] sm:$0x1] %vm250, 0.0
      %266 = vst.msk [vmem:[#allocation2 + $0x79] sm:$0x1] %vm250, 0.0
      %vm267 = vcmask 57344
      %268 = vst.msk [vmem:[#allocation3] sm:$0x1] %vm267, 0.0
      %269 = vst.msk [vmem:[#allocation3 + $0x10] sm:$0x1] %vm267, 0.0
      %270 = vst.msk [vmem:[#allocation3 + $0x20] sm:$0x1] %vm267, 0.0
      %271 = vst.msk [vmem:[#allocation3 + $0x30] sm:$0x1] %vm267, 0.0
      %272 = vst.msk [vmem:[#allocation3 + $0x40] sm:$0x1] %vm267, 0.0
      %273 = vst.msk [vmem:[#allocation3 + $0x50] sm:$0x1] %vm267, 0.0
      %274 = vst.msk [vmem:[#allocation3 + $0x9] sm:$0x1] %vm267, 0.0
      %275 = vst.msk [vmem:[#allocation3 + $0x19] sm:$0x1] %vm267, 0.0
      %276 = vst.msk [vmem:[#allocation3 + $0x29] sm:$0x1] %vm267, 0.0
      %277 = vst.msk [vmem:[#allocation3 + $0x39] sm:$0x1] %vm267, 0.0
      %278 = vst.msk [vmem:[#allocation3 + $0x49] sm:$0x1] %vm267, 0.0
      %279 = vst.msk [vmem:[#allocation3 + $0x59] sm:$0x1] %vm267, 0.0
      %s280 = smul.u32 %s21, 8
      %s281 = smul.u32 %s280, 16
      %s282 = scalar_lea.vmem %s237, %s281
      %v283 = vld [vmem:[%s282] sm:$0xff]
      %v284 = vld [vmem:[%s282 + $0x8] sm:$0xff]
      %v285 = vld [vmem:[%s282 + $0x10] sm:$0xff]
      %v286 = vld [vmem:[%s282 + $0x18] sm:$0xff]
      %v287 = vld [vmem:[%s282 + $0x20] sm:$0xff]
      %v288 = vld [vmem:[%s282 + $0x28] sm:$0xff]
      %v289 = vld [vmem:[%s282 + $0x30] sm:$0xff]
      %v290 = vld [vmem:[%s282 + $0x38] sm:$0xff]
      %v291 = vld [vmem:[%s282 + $0x40] sm:$0xff]
      %v292 = vld [vmem:[%s282 + $0x48] sm:$0xff]
      %v293 = vld [vmem:[%s282 + $0x50] sm:$0xff]
      %v294 = vld [vmem:[%s282 + $0x58] sm:$0xff]
      %v295 = vld [vmem:[%s282 + $0x60] sm:$0xff]
      %v296 = vld [vmem:[%s282 + $0x68] sm:$0xff]
      %v297 = vld [vmem:[%s282 + $0x70] sm:$0xff]
      %v298 = vld [vmem:[%s282 + $0x78] sm:$0xff]
      %v299 = vmax.f32 %v283, %v285
      %v300 = vmax.f32 %v284, %v286
      %v301 = vmax.f32 %v287, %v289
      %v302 = vmax.f32 %v288, %v290
      %v303 = vmax.f32 %v291, %v293
      %v304 = vmax.f32 %v292, %v294
      %v305 = vmax.f32 %v295, %v297
      %v306 = vmax.f32 %v296, %v298
      %v315 = vcombine.high %v299, %v299
      %v317 = vunpack.c.l.s4 1983009808
      %v318 = vunpack.c.0.s8 %v317
      %v319 = vlaneseq
      %v320 = vshrl.u32 %v319, 7
      %v321 = vsub.s32 %v318, %v320
      %v322 = vrot.slane %v299, %v321
      %v324 = vunpack.c.l.s4 1983009808
      %v325 = vunpack.c.0.s8 %v324
      %v326 = vlaneseq
      %v327 = vshrl.u32 %v326, 7
      %v328 = vsub.s32 %v325, %v327
      %v329 = vrot.slane %v315, %v328
      %v330 = vcombine.high %v322, %v322
      %v331 = vcombine.high %v329, %v329
      %v332 = vcombine.high %v300, %v300
      %v334 = vunpack.c.l.s4 1983009808
      %v335 = vunpack.c.0.s8 %v334
      %v336 = vlaneseq
      %v337 = vshrl.u32 %v336, 7
      %v338 = vsub.s32 %v335, %v337
      %v339 = vrot.slane %v300, %v338
      %v341 = vunpack.c.l.s4 1983009808
      %v342 = vunpack.c.0.s8 %v341
      %v343 = vlaneseq
      %v344 = vshrl.u32 %v343, 7
      %v345 = vsub.s32 %v342, %v344
      %v346 = vrot.slane %v332, %v345
      %v347 = vcombine.high %v339, %v339
      %v348 = vcombine.high %v346, %v346
      %v349 = vcombine.high %v301, %v301
      %v351 = vunpack.c.l.s4 1983009808
      %v352 = vunpack.c.0.s8 %v351
      %v353 = vlaneseq
      %v354 = vshrl.u32 %v353, 7
      %v355 = vsub.s32 %v352, %v354
      %v356 = vrot.slane %v301, %v355
      %v358 = vunpack.c.l.s4 1983009808
      %v359 = vunpack.c.0.s8 %v358
      %v360 = vlaneseq
      %v361 = vshrl.u32 %v360, 7
      %v362 = vsub.s32 %v359, %v361
      %v363 = vrot.slane %v349, %v362
      %v364 = vcombine.high %v356, %v356
      %v365 = vcombine.high %v363, %v363
      %v366 = vcombine.high %v302, %v302
      %v368 = vunpack.c.l.s4 1983009808
      %v369 = vunpack.c.0.s8 %v368
      %v370 = vlaneseq
      %v371 = vshrl.u32 %v370, 7
      %v372 = vsub.s32 %v369, %v371
      %v373 = vrot.slane %v302, %v372
      %v375 = vunpack.c.l.s4 1983009808
      %v376 = vunpack.c.0.s8 %v375
      %v377 = vlaneseq
      %v378 = vshrl.u32 %v377, 7
      %v379 = vsub.s32 %v376, %v378
      %v380 = vrot.slane %v366, %v379
      %v381 = vcombine.high %v373, %v373
      %v382 = vcombine.high %v380, %v380
      %v383 = vcombine.high %v303, %v303
      %v385 = vunpack.c.l.s4 1983009808
      %v386 = vunpack.c.0.s8 %v385
      %v387 = vlaneseq
      %v388 = vshrl.u32 %v387, 7
      %v389 = vsub.s32 %v386, %v388
      %v390 = vrot.slane %v303, %v389
      %v392 = vunpack.c.l.s4 1983009808
      %v393 = vunpack.c.0.s8 %v392
      %v394 = vlaneseq
      %v395 = vshrl.u32 %v394, 7
      %v396 = vsub.s32 %v393, %v395
      %v397 = vrot.slane %v383, %v396
      %v398 = vcombine.high %v390, %v390
      %v399 = vcombine.high %v397, %v397
      %v400 = vcombine.high %v304, %v304
      %v402 = vunpack.c.l.s4 1983009808
      %v403 = vunpack.c.0.s8 %v402
      %v404 = vlaneseq
      %v405 = vshrl.u32 %v404, 7
      %v406 = vsub.s32 %v403, %v405
      %v407 = vrot.slane %v304, %v406
      %v409 = vunpack.c.l.s4 1983009808
      %v410 = vunpack.c.0.s8 %v409
      %v411 = vlaneseq
      %v412 = vshrl.u32 %v411, 7
      %v413 = vsub.s32 %v410, %v412
      %v414 = vrot.slane %v400, %v413
      %v415 = vcombine.high %v407, %v407
      %v416 = vcombine.high %v414, %v414
      %v417 = vcombine.high %v305, %v305
      %v419 = vunpack.c.l.s4 1983009808
      %v420 = vunpack.c.0.s8 %v419
      %v421 = vlaneseq
      %v422 = vshrl.u32 %v421, 7
      %v423 = vsub.s32 %v420, %v422
      %v424 = vrot.slane %v305, %v423
      %v426 = vunpack.c.l.s4 1983009808
      %v427 = vunpack.c.0.s8 %v426
      %v428 = vlaneseq
      %v429 = vshrl.u32 %v428, 7
      %v430 = vsub.s32 %v427, %v429
      %v431 = vrot.slane %v417, %v430
      %v432 = vcombine.high %v424, %v424
      %v433 = vcombine.high %v431, %v431
      %v434 = vcombine.high %v306, %v306
      %v436 = vunpack.c.l.s4 1983009808
      %v437 = vunpack.c.0.s8 %v436
      %v438 = vlaneseq
      %v439 = vshrl.u32 %v438, 7
      %v440 = vsub.s32 %v437, %v439
      %v441 = vrot.slane %v306, %v440
      %v443 = vunpack.c.l.s4 1983009808
      %v444 = vunpack.c.0.s8 %v443
      %v445 = vlaneseq
      %v446 = vshrl.u32 %v445, 7
      %v447 = vsub.s32 %v444, %v446
      %v448 = vrot.slane %v434, %v447
      %v449 = vcombine.high %v441, %v441
      %v450 = vcombine.high %v448, %v448
      %v483 = vrot.slane %v322, 7
      %v484 = vrot.slane %v483, 2
      %v485 = vrot.slane %v330, 7
      %v486 = vrot.slane %v485, 2
      %v487 = vrot.slane %v329, 7
      %v488 = vrot.slane %v487, 2
      %v489 = vrot.slane %v331, 7
      %v490 = vrot.slane %v489, 2
      %v491 = vrot.slane %v339, 7
      %v492 = vrot.slane %v491, 2
      %v493 = vrot.slane %v347, 7
      %v494 = vrot.slane %v493, 2
      %v495 = vrot.slane %v346, 7
      %v496 = vrot.slane %v495, 2
      %v497 = vrot.slane %v348, 7
      %v498 = vrot.slane %v497, 2
      %v499 = vrot.slane %v356, 7
      %v500 = vrot.slane %v499, 2
      %v501 = vrot.slane %v364, 7
      %v502 = vrot.slane %v501, 2
      %v503 = vrot.slane %v363, 7
      %v504 = vrot.slane %v503, 2
      %v505 = vrot.slane %v365, 7
      %v506 = vrot.slane %v505, 2
      %v507 = vrot.slane %v373, 7
      %v508 = vrot.slane %v507, 2
      %v509 = vrot.slane %v381, 7
      %v510 = vrot.slane %v509, 2
      %v511 = vrot.slane %v380, 7
      %v512 = vrot.slane %v511, 2
      %v513 = vrot.slane %v382, 7
      %v514 = vrot.slane %v513, 2
      %v515 = vrot.slane %v390, 7
      %v516 = vrot.slane %v515, 2
      %v517 = vrot.slane %v398, 7
      %v518 = vrot.slane %v517, 2
      %v519 = vrot.slane %v397, 7
      %v520 = vrot.slane %v519, 2
      %v521 = vrot.slane %v399, 7
      %v522 = vrot.slane %v521, 2
      %v523 = vrot.slane %v407, 7
      %v524 = vrot.slane %v523, 2
      %v525 = vrot.slane %v415, 7
      %v526 = vrot.slane %v525, 2
      %v527 = vrot.slane %v414, 7
      %v528 = vrot.slane %v527, 2
      %v529 = vrot.slane %v416, 7
      %v530 = vrot.slane %v529, 2
      %v531 = vrot.slane %v424, 7
      %v532 = vrot.slane %v531, 2
      %v533 = vrot.slane %v432, 7
      %v534 = vrot.slane %v533, 2
      %v535 = vrot.slane %v431, 7
      %v536 = vrot.slane %v535, 2
      %v537 = vrot.slane %v433, 7
      %v538 = vrot.slane %v537, 2
      %v539 = vrot.slane %v441, 7
      %v540 = vrot.slane %v539, 2
      %v541 = vrot.slane %v449, 7
      %v542 = vrot.slane %v541, 2
      %v543 = vrot.slane %v448, 7
      %v544 = vrot.slane %v543, 2
      %v545 = vrot.slane %v450, 7
      %v546 = vrot.slane %v545, 2
      %v579 = vmax.f32 %v322, %v484
      %v580 = vmax.f32 %v330, %v486
      %v581 = vmax.f32 %v329, %v488
      %v582 = vmax.f32 %v331, %v490
      %v583 = vmax.f32 %v339, %v492
      %v584 = vmax.f32 %v347, %v494
      %v585 = vmax.f32 %v346, %v496
      %v586 = vmax.f32 %v348, %v498
      %v587 = vmax.f32 %v356, %v500
      %v588 = vmax.f32 %v364, %v502
      %v589 = vmax.f32 %v363, %v504
      %v590 = vmax.f32 %v365, %v506
      %v591 = vmax.f32 %v373, %v508
      %v592 = vmax.f32 %v381, %v510
      %v593 = vmax.f32 %v380, %v512
      %v594 = vmax.f32 %v382, %v514
      %v595 = vmax.f32 %v390, %v516
      %v596 = vmax.f32 %v398, %v518
      %v597 = vmax.f32 %v397, %v520
      %v598 = vmax.f32 %v399, %v522
      %v599 = vmax.f32 %v407, %v524
      %v600 = vmax.f32 %v415, %v526
      %v601 = vmax.f32 %v414, %v528
      %v602 = vmax.f32 %v416, %v530
      %v603 = vmax.f32 %v424, %v532
      %v604 = vmax.f32 %v432, %v534
      %v605 = vmax.f32 %v431, %v536
      %v606 = vmax.f32 %v433, %v538
      %v607 = vmax.f32 %v441, %v540
      %v608 = vmax.f32 %v449, %v542
      %v609 = vmax.f32 %v448, %v544
      %v610 = vmax.f32 %v450, %v546
      %v643 = vlaneseq
      %v644 = vshrl.u32 %v643, 7
      %v645 = vsub.s32 0, %v644
      %v646 = vrot.slane %v579, %v645
      %v647 = vlaneseq
      %v648 = vshrl.u32 %v647, 7
      %v649 = vsub.s32 0, %v648
      %v650 = vrot.slane %v580, %v649
      %v651 = vlaneseq
      %v652 = vshrl.u32 %v651, 7
      %v653 = vsub.s32 0, %v652
      %v654 = vrot.slane %v581, %v653
      %v655 = vlaneseq
      %v656 = vshrl.u32 %v655, 7
      %v657 = vsub.s32 0, %v656
      %v658 = vrot.slane %v582, %v657
      %v659 = vlaneseq
      %v660 = vshrl.u32 %v659, 7
      %v661 = vsub.s32 0, %v660
      %v662 = vrot.slane %v583, %v661
      %v663 = vlaneseq
      %v664 = vshrl.u32 %v663, 7
      %v665 = vsub.s32 0, %v664
      %v666 = vrot.slane %v584, %v665
      %v667 = vlaneseq
      %v668 = vshrl.u32 %v667, 7
      %v669 = vsub.s32 0, %v668
      %v670 = vrot.slane %v585, %v669
      %v671 = vlaneseq
      %v672 = vshrl.u32 %v671, 7
      %v673 = vsub.s32 0, %v672
      %v674 = vrot.slane %v586, %v673
      %v675 = vlaneseq
      %v676 = vshrl.u32 %v675, 7
      %v677 = vsub.s32 0, %v676
      %v678 = vrot.slane %v587, %v677
      %v679 = vlaneseq
      %v680 = vshrl.u32 %v679, 7
      %v681 = vsub.s32 0, %v680
      %v682 = vrot.slane %v588, %v681
      %v683 = vlaneseq
      %v684 = vshrl.u32 %v683, 7
      %v685 = vsub.s32 0, %v684
      %v686 = vrot.slane %v589, %v685
      %v687 = vlaneseq
      %v688 = vshrl.u32 %v687, 7
      %v689 = vsub.s32 0, %v688
      %v690 = vrot.slane %v590, %v689
      %v691 = vlaneseq
      %v692 = vshrl.u32 %v691, 7
      %v693 = vsub.s32 0, %v692
      %v694 = vrot.slane %v591, %v693
      %v695 = vlaneseq
      %v696 = vshrl.u32 %v695, 7
      %v697 = vsub.s32 0, %v696
      %v698 = vrot.slane %v592, %v697
      %v699 = vlaneseq
      %v700 = vshrl.u32 %v699, 7
      %v701 = vsub.s32 0, %v700
      %v702 = vrot.slane %v593, %v701
      %v703 = vlaneseq
      %v704 = vshrl.u32 %v703, 7
      %v705 = vsub.s32 0, %v704
      %v706 = vrot.slane %v594, %v705
      %v707 = vlaneseq
      %v708 = vshrl.u32 %v707, 7
      %v709 = vsub.s32 0, %v708
      %v710 = vrot.slane %v595, %v709
      %v711 = vlaneseq
      %v712 = vshrl.u32 %v711, 7
      %v713 = vsub.s32 0, %v712
      %v714 = vrot.slane %v596, %v713
      %v715 = vlaneseq
      %v716 = vshrl.u32 %v715, 7
      %v717 = vsub.s32 0, %v716
      %v718 = vrot.slane %v597, %v717
      %v719 = vlaneseq
      %v720 = vshrl.u32 %v719, 7
      %v721 = vsub.s32 0, %v720
      %v722 = vrot.slane %v598, %v721
      %v723 = vlaneseq
      %v724 = vshrl.u32 %v723, 7
      %v725 = vsub.s32 0, %v724
      %v726 = vrot.slane %v599, %v725
      %v727 = vlaneseq
      %v728 = vshrl.u32 %v727, 7
      %v729 = vsub.s32 0, %v728
      %v730 = vrot.slane %v600, %v729
      %v731 = vlaneseq
      %v732 = vshrl.u32 %v731, 7
      %v733 = vsub.s32 0, %v732
      %v734 = vrot.slane %v601, %v733
      %v735 = vlaneseq
      %v736 = vshrl.u32 %v735, 7
      %v737 = vsub.s32 0, %v736
      %v738 = vrot.slane %v602, %v737
      %v739 = vlaneseq
      %v740 = vshrl.u32 %v739, 7
      %v741 = vsub.s32 0, %v740
      %v742 = vrot.slane %v603, %v741
      %v743 = vlaneseq
      %v744 = vshrl.u32 %v743, 7
      %v745 = vsub.s32 0, %v744
      %v746 = vrot.slane %v604, %v745
      %v747 = vlaneseq
      %v748 = vshrl.u32 %v747, 7
      %v749 = vsub.s32 0, %v748
      %v750 = vrot.slane %v605, %v749
      %v751 = vlaneseq
      %v752 = vshrl.u32 %v751, 7
      %v753 = vsub.s32 0, %v752
      %v754 = vrot.slane %v606, %v753
      %v755 = vlaneseq
      %v756 = vshrl.u32 %v755, 7
      %v757 = vsub.s32 0, %v756
      %v758 = vrot.slane %v607, %v757
      %v759 = vlaneseq
      %v760 = vshrl.u32 %v759, 7
      %v761 = vsub.s32 0, %v760
      %v762 = vrot.slane %v608, %v761
      %v763 = vlaneseq
      %v764 = vshrl.u32 %v763, 7
      %v765 = vsub.s32 0, %v764
      %v766 = vrot.slane %v609, %v765
      %v767 = vlaneseq
      %v768 = vshrl.u32 %v767, 7
      %v769 = vsub.s32 0, %v768
      %v770 = vrot.slane %v610, %v769
      %vm771 = vcmask 1041409
      %v772 = vsel %vm771, %v650, %v646
      %vm773 = vcmask 1042434
      %v774 = vsel %vm773, %v654, %v772
      %vm775 = vcmask 1043459
      %v776 = vsel %vm775, %v658, %v774
      %vm777 = vcmask 1044484
      %v778 = vsel %vm777, %v662, %v776
      %vm779 = vcmask 1045509
      %v780 = vsel %vm779, %v666, %v778
      %vm781 = vcmask 1046534
      %v782 = vsel %vm781, %v670, %v780
      %vm783 = vcmask 1047559
      %v784 = vsel %vm783, %v674, %v782
      %v785 = vsel %vm771, %v682, %v678
      %v786 = vsel %vm773, %v686, %v785
      %v787 = vsel %vm775, %v690, %v786
      %v788 = vsel %vm777, %v694, %v787
      %v789 = vsel %vm779, %v698, %v788
      %v790 = vsel %vm781, %v702, %v789
      %v791 = vsel %vm783, %v706, %v790
      %v792 = vsel %vm771, %v714, %v710
      %v793 = vsel %vm773, %v718, %v792
      %v794 = vsel %vm775, %v722, %v793
      %v795 = vsel %vm777, %v726, %v794
      %v796 = vsel %vm779, %v730, %v795
      %v797 = vsel %vm781, %v734, %v796
      %v798 = vsel %vm783, %v738, %v797
      %v799 = vsel %vm771, %v746, %v742
      %v800 = vsel %vm773, %v750, %v799
      %v801 = vsel %vm775, %v754, %v800
      %v802 = vsel %vm777, %v758, %v801
      %v803 = vsel %vm779, %v762, %v802
      %v804 = vsel %vm781, %v766, %v803
      %v805 = vsel %vm783, %v770, %v804
      %s810 = scalar_lea.vmem [#allocation2], 32
      %vm811 = vcmask 31744
      %812 = vst.msk [vmem:[%s810 + $0x1] sm:$0xff] %vm811, %v784
      %813 = vst.msk [vmem:[%s810 + $0x11] sm:$0xff] %vm811, %v791
      %814 = vst.msk [vmem:[%s810 + $0x21] sm:$0xff] %vm811, %v798
      %815 = vst.msk [vmem:[%s810 + $0x31] sm:$0xff] %vm811, %v805
      %p816 = scmp.eq.s32.totalorder %s21, 0
      // Predicated region
      $region41: #{down_forward.1} parent=39 // pred_check
        %p817 = pneg %p816
      $region42: #{down_forward.1} parent=39 // pred_check_branch
        %819 = sbr.rel (%p817) target = $region44
      $region43: #{down_forward.1} parent=39 // pred_region
        %820 = vst.msk [vmem:[#allocation2] sm:$0xff] %vm811, 0.0
        %vm821 = vcmask 25600
        %822 = vst.msk [vmem:[#allocation2 + $0x8] sm:$0x3] %vm821, 0.0
        %823 = vst.msk [vmem:[#allocation2 + $0x10] sm:$0xff] %vm811, 0.0
        %824 = vst.msk [vmem:[#allocation2 + $0x18] sm:$0x3] %vm821, 0.0
      $region44: #{down_forward.1} parent=39 // pred_fallthru
        _
      %p825 = scmp.gt.s32.totalorder %s21, 0
      // Predicated region
      $region45: #{down_forward.1} parent=39 // pred_check
        %p826 = pneg %p825
      $region46: #{down_forward.1} parent=39 // pred_check_branch
        %828 = sbr.rel (%p826) target = $region48
      $region47: #{down_forward.1} parent=39 // pred_region
        %s829 = ssub.s32 %s280, 4
        %s830 = smul.u32 %s829, 16
        %s831 = scalar_lea.vmem %s237, %s830
        %v832 = vld [vmem:[%s831] sm:$0xff]
        %v833 = vld [vmem:[%s831 + $0x8] sm:$0xff]
        %v834 = vld [vmem:[%s831 + $0x10] sm:$0xff]
        %v835 = vld [vmem:[%s831 + $0x18] sm:$0xff]
        %v836 = vld [vmem:[%s831 + $0x20] sm:$0xff]
        %v837 = vld [vmem:[%s831 + $0x28] sm:$0xff]
        %v838 = vld [vmem:[%s831 + $0x30] sm:$0xff]
        %v839 = vld [vmem:[%s831 + $0x38] sm:$0xff]
        %v840 = vmax.f32 %v832, %v834
        %v841 = vmax.f32 %v833, %v835
        %v842 = vmax.f32 %v836, %v838
        %v843 = vmax.f32 %v837, %v839
        %v848 = vcombine.high %v840, %v840
        %v850 = vunpack.c.l.s4 1983009808
        %v851 = vunpack.c.0.s8 %v850
        %v852 = vlaneseq
        %v853 = vshrl.u32 %v852, 7
        %v854 = vsub.s32 %v851, %v853
        %v855 = vrot.slane %v840, %v854
        %v857 = vunpack.c.l.s4 1983009808
        %v858 = vunpack.c.0.s8 %v857
        %v859 = vlaneseq
        %v860 = vshrl.u32 %v859, 7
        %v861 = vsub.s32 %v858, %v860
        %v862 = vrot.slane %v848, %v861
        %v863 = vcombine.high %v855, %v855
        %v864 = vcombine.high %v862, %v862
        %v865 = vcombine.high %v841, %v841
        %v867 = vunpack.c.l.s4 1983009808
        %v868 = vunpack.c.0.s8 %v867
        %v869 = vlaneseq
        %v870 = vshrl.u32 %v869, 7
        %v871 = vsub.s32 %v868, %v870
        %v872 = vrot.slane %v841, %v871
        %v874 = vunpack.c.l.s4 1983009808
        %v875 = vunpack.c.0.s8 %v874
        %v876 = vlaneseq
        %v877 = vshrl.u32 %v876, 7
        %v878 = vsub.s32 %v875, %v877
        %v879 = vrot.slane %v865, %v878
        %v880 = vcombine.high %v872, %v872
        %v881 = vcombine.high %v879, %v879
        %v882 = vcombine.high %v842, %v842
        %v884 = vunpack.c.l.s4 1983009808
        %v885 = vunpack.c.0.s8 %v884
        %v886 = vlaneseq
        %v887 = vshrl.u32 %v886, 7
        %v888 = vsub.s32 %v885, %v887
        %v889 = vrot.slane %v842, %v888
        %v891 = vunpack.c.l.s4 1983009808
        %v892 = vunpack.c.0.s8 %v891
        %v893 = vlaneseq
        %v894 = vshrl.u32 %v893, 7
        %v895 = vsub.s32 %v892, %v894
        %v896 = vrot.slane %v882, %v895
        %v897 = vcombine.high %v889, %v889
        %v898 = vcombine.high %v896, %v896
        %v899 = vcombine.high %v843, %v843
        %v901 = vunpack.c.l.s4 1983009808
        %v902 = vunpack.c.0.s8 %v901
        %v903 = vlaneseq
        %v904 = vshrl.u32 %v903, 7
        %v905 = vsub.s32 %v902, %v904
        %v906 = vrot.slane %v843, %v905
        %v908 = vunpack.c.l.s4 1983009808
        %v909 = vunpack.c.0.s8 %v908
        %v910 = vlaneseq
        %v911 = vshrl.u32 %v910, 7
        %v912 = vsub.s32 %v909, %v911
        %v913 = vrot.slane %v899, %v912
        %v914 = vcombine.high %v906, %v906
        %v915 = vcombine.high %v913, %v913
        %v932 = vrot.slane %v855, 7
        %v933 = vrot.slane %v932, 2
        %v934 = vrot.slane %v863, 7
        %v935 = vrot.slane %v934, 2
        %v936 = vrot.slane %v862, 7
        %v937 = vrot.slane %v936, 2
        %v938 = vrot.slane %v864, 7
        %v939 = vrot.slane %v938, 2
        %v940 = vrot.slane %v872, 7
        %v941 = vrot.slane %v940, 2
        %v942 = vrot.slane %v880, 7
        %v943 = vrot.slane %v942, 2
        %v944 = vrot.slane %v879, 7
        %v945 = vrot.slane %v944, 2
        %v946 = vrot.slane %v881, 7
        %v947 = vrot.slane %v946, 2
        %v948 = vrot.slane %v889, 7
        %v949 = vrot.slane %v948, 2
        %v950 = vrot.slane %v897, 7
        %v951 = vrot.slane %v950, 2
        %v952 = vrot.slane %v896, 7
        %v953 = vrot.slane %v952, 2
        %v954 = vrot.slane %v898, 7
        %v955 = vrot.slane %v954, 2
        %v956 = vrot.slane %v906, 7
        %v957 = vrot.slane %v956, 2
        %v958 = vrot.slane %v914, 7
        %v959 = vrot.slane %v958, 2
        %v960 = vrot.slane %v913, 7
        %v961 = vrot.slane %v960, 2
        %v962 = vrot.slane %v915, 7
        %v963 = vrot.slane %v962, 2
        %v980 = vmax.f32 %v855, %v933
        %v981 = vmax.f32 %v863, %v935
        %v982 = vmax.f32 %v862, %v937
        %v983 = vmax.f32 %v864, %v939
        %v984 = vmax.f32 %v872, %v941
        %v985 = vmax.f32 %v880, %v943
        %v986 = vmax.f32 %v879, %v945
        %v987 = vmax.f32 %v881, %v947
        %v988 = vmax.f32 %v889, %v949
        %v989 = vmax.f32 %v897, %v951
        %v990 = vmax.f32 %v896, %v953
        %v991 = vmax.f32 %v898, %v955
        %v992 = vmax.f32 %v906, %v957
        %v993 = vmax.f32 %v914, %v959
        %v994 = vmax.f32 %v913, %v961
        %v995 = vmax.f32 %v915, %v963
        %v1012 = vlaneseq
        %v1013 = vshrl.u32 %v1012, 7
        %v1014 = vsub.s32 0, %v1013
        %v1015 = vrot.slane %v980, %v1014
        %v1016 = vlaneseq
        %v1017 = vshrl.u32 %v1016, 7
        %v1018 = vsub.s32 0, %v1017
        %v1019 = vrot.slane %v981, %v1018
        %v1020 = vlaneseq
        %v1021 = vshrl.u32 %v1020, 7
        %v1022 = vsub.s32 0, %v1021
        %v1023 = vrot.slane %v982, %v1022
        %v1024 = vlaneseq
        %v1025 = vshrl.u32 %v1024, 7
        %v1026 = vsub.s32 0, %v1025
        %v1027 = vrot.slane %v983, %v1026
        %v1028 = vlaneseq
        %v1029 = vshrl.u32 %v1028, 7
        %v1030 = vsub.s32 0, %v1029
        %v1031 = vrot.slane %v984, %v1030
        %v1032 = vlaneseq
        %v1033 = vshrl.u32 %v1032, 7
        %v1034 = vsub.s32 0, %v1033
        %v1035 = vrot.slane %v985, %v1034
        %v1036 = vlaneseq
        %v1037 = vshrl.u32 %v1036, 7
        %v1038 = vsub.s32 0, %v1037
        %v1039 = vrot.slane %v986, %v1038
        %v1040 = vlaneseq
        %v1041 = vshrl.u32 %v1040, 7
        %v1042 = vsub.s32 0, %v1041
        %v1043 = vrot.slane %v987, %v1042
        %v1044 = vlaneseq
        %v1045 = vshrl.u32 %v1044, 7
        %v1046 = vsub.s32 0, %v1045
        %v1047 = vrot.slane %v988, %v1046
        %v1048 = vlaneseq
        %v1049 = vshrl.u32 %v1048, 7
        %v1050 = vsub.s32 0, %v1049
        %v1051 = vrot.slane %v989, %v1050
        %v1052 = vlaneseq
        %v1053 = vshrl.u32 %v1052, 7
        %v1054 = vsub.s32 0, %v1053
        %v1055 = vrot.slane %v990, %v1054
        %v1056 = vlaneseq
        %v1057 = vshrl.u32 %v1056, 7
        %v1058 = vsub.s32 0, %v1057
        %v1059 = vrot.slane %v991, %v1058
        %v1060 = vlaneseq
        %v1061 = vshrl.u32 %v1060, 7
        %v1062 = vsub.s32 0, %v1061
        %v1063 = vrot.slane %v992, %v1062
        %v1064 = vlaneseq
        %v1065 = vshrl.u32 %v1064, 7
        %v1066 = vsub.s32 0, %v1065
        %v1067 = vrot.slane %v993, %v1066
        %v1068 = vlaneseq
        %v1069 = vshrl.u32 %v1068, 7
        %v1070 = vsub.s32 0, %v1069
        %v1071 = vrot.slane %v994, %v1070
        %v1072 = vlaneseq
        %v1073 = vshrl.u32 %v1072, 7
        %v1074 = vsub.s32 0, %v1073
        %v1075 = vrot.slane %v995, %v1074
        %v1076 = vsel %vm771, %v1019, %v1015
        %v1077 = vsel %vm773, %v1023, %v1076
        %v1078 = vsel %vm775, %v1027, %v1077
        %v1079 = vsel %vm777, %v1031, %v1078
        %v1080 = vsel %vm779, %v1035, %v1079
        %v1081 = vsel %vm781, %v1039, %v1080
        %v1082 = vsel %vm783, %v1043, %v1081
        %v1083 = vsel %vm771, %v1051, %v1047
        %v1084 = vsel %vm773, %v1055, %v1083
        %v1085 = vsel %vm775, %v1059, %v1084
        %v1086 = vsel %vm777, %v1063, %v1085
        %v1087 = vsel %vm779, %v1067, %v1086
        %v1088 = vsel %vm781, %v1071, %v1087
        %v1089 = vsel %vm783, %v1075, %v1088
        %1092 = vst.msk [vmem:[#allocation2 + $0x1] sm:$0xff] %vm811, %v1082
        %1093 = vst.msk [vmem:[#allocation2 + $0x11] sm:$0xff] %vm811, %v1089
      $region48: #{down_forward.1} parent=39 // pred_fallthru
        _
      %p1094 = scmp.eq.s32.totalorder %s21, 1
      // Predicated region
      $region49: #{down_forward.1} parent=39 // pred_check
        %p1095 = pneg %p1094
      $region50: #{down_forward.1} parent=39 // pred_check_branch
        %1097 = sbr.rel (%p1095) target = $region52
      $region51: #{down_forward.1} parent=39 // pred_region
        %s1098 = scalar_lea.vmem [#allocation2], 96
        %1099 = vst.msk [vmem:[%s1098] sm:$0xff] %vm811, 0.0
        %vm1100 = vcmask 25600
        %1101 = vst.msk [vmem:[%s1098 + $0x8] sm:$0x3] %vm1100, 0.0
        %1102 = vst.msk [vmem:[%s1098 + $0x10] sm:$0xff] %vm811, 0.0
        %1103 = vst.msk [vmem:[%s1098 + $0x18] sm:$0x3] %vm1100, 0.0
      $region52: #{down_forward.1} parent=39 // pred_fallthru
        _
      %p1104 = scmp.lt.s32.totalorder %s21, 1
      // Predicated region
      $region53: #{down_forward.1} parent=39 // pred_check
        %p1105 = pneg %p1104
      $region54: #{down_forward.1} parent=39 // pred_check_branch
        %1107 = sbr.rel (%p1105) target = $region56
      $region55: #{down_forward.1} parent=39 // pred_region
        %s1108 = sadd.s32 %s249, 4
        %s1109 = smul.u32 %s1108, 2
        %s1110 = smul.u32 %s1109, 16
        %s1111 = scalar_lea.vmem %s237, %s1110
        %v1112 = vld [vmem:[%s1111] sm:$0xff]
        %v1113 = vld [vmem:[%s1111 + $0x8] sm:$0xff]
        %v1114 = vld [vmem:[%s1111 + $0x10] sm:$0xff]
        %v1115 = vld [vmem:[%s1111 + $0x18] sm:$0xff]
        %v1116 = vld [vmem:[%s1111 + $0x20] sm:$0xff]
        %v1117 = vld [vmem:[%s1111 + $0x28] sm:$0xff]
        %v1118 = vld [vmem:[%s1111 + $0x30] sm:$0xff]
        %v1119 = vld [vmem:[%s1111 + $0x38] sm:$0xff]
        %v1120 = vmax.f32 %v1112, %v1114
        %v1121 = vmax.f32 %v1113, %v1115
        %v1122 = vmax.f32 %v1116, %v1118
        %v1123 = vmax.f32 %v1117, %v1119
        %v1128 = vcombine.high %v1120, %v1120
        %v1130 = vunpack.c.l.s4 1983009808
        %v1131 = vunpack.c.0.s8 %v1130
        %v1132 = vlaneseq
        %v1133 = vshrl.u32 %v1132, 7
        %v1134 = vsub.s32 %v1131, %v1133
        %v1135 = vrot.slane %v1120, %v1134
        %v1137 = vunpack.c.l.s4 1983009808
        %v1138 = vunpack.c.0.s8 %v1137
        %v1139 = vlaneseq
        %v1140 = vshrl.u32 %v1139, 7
        %v1141 = vsub.s32 %v1138, %v1140
        %v1142 = vrot.slane %v1128, %v1141
        %v1143 = vcombine.high %v1135, %v1135
        %v1144 = vcombine.high %v1142, %v1142
        %v1145 = vcombine.high %v1121, %v1121
        %v1147 = vunpack.c.l.s4 1983009808
        %v1148 = vunpack.c.0.s8 %v1147
        %v1149 = vlaneseq
        %v1150 = vshrl.u32 %v1149, 7
        %v1151 = vsub.s32 %v1148, %v1150
        %v1152 = vrot.slane %v1121, %v1151
        %v1154 = vunpack.c.l.s4 1983009808
        %v1155 = vunpack.c.0.s8 %v1154
        %v1156 = vlaneseq
        %v1157 = vshrl.u32 %v1156, 7
        %v1158 = vsub.s32 %v1155, %v1157
        %v1159 = vrot.slane %v1145, %v1158
        %v1160 = vcombine.high %v1152, %v1152
        %v1161 = vcombine.high %v1159, %v1159
        %v1162 = vcombine.high %v1122, %v1122
        %v1164 = vunpack.c.l.s4 1983009808
        %v1165 = vunpack.c.0.s8 %v1164
        %v1166 = vlaneseq
        %v1167 = vshrl.u32 %v1166, 7
        %v1168 = vsub.s32 %v1165, %v1167
        %v1169 = vrot.slane %v1122, %v1168
        %v1171 = vunpack.c.l.s4 1983009808
        %v1172 = vunpack.c.0.s8 %v1171
        %v1173 = vlaneseq
        %v1174 = vshrl.u32 %v1173, 7
        %v1175 = vsub.s32 %v1172, %v1174
        %v1176 = vrot.slane %v1162, %v1175
        %v1177 = vcombine.high %v1169, %v1169
        %v1178 = vcombine.high %v1176, %v1176
        %v1179 = vcombine.high %v1123, %v1123
        %v1181 = vunpack.c.l.s4 1983009808
        %v1182 = vunpack.c.0.s8 %v1181
        %v1183 = vlaneseq
        %v1184 = vshrl.u32 %v1183, 7
        %v1185 = vsub.s32 %v1182, %v1184
        %v1186 = vrot.slane %v1123, %v1185
        %v1188 = vunpack.c.l.s4 1983009808
        %v1189 = vunpack.c.0.s8 %v1188
        %v1190 = vlaneseq
        %v1191 = vshrl.u32 %v1190, 7
        %v1192 = vsub.s32 %v1189, %v1191
        %v1193 = vrot.slane %v1179, %v1192
        %v1194 = vcombine.high %v1186, %v1186
        %v1195 = vcombine.high %v1193, %v1193
        %v1212 = vrot.slane %v1135, 7
        %v1213 = vrot.slane %v1212, 2
        %v1214 = vrot.slane %v1143, 7
        %v1215 = vrot.slane %v1214, 2
        %v1216 = vrot.slane %v1142, 7
        %v1217 = vrot.slane %v1216, 2
        %v1218 = vrot.slane %v1144, 7
        %v1219 = vrot.slane %v1218, 2
        %v1220 = vrot.slane %v1152, 7
        %v1221 = vrot.slane %v1220, 2
        %v1222 = vrot.slane %v1160, 7
        %v1223 = vrot.slane %v1222, 2
        %v1224 = vrot.slane %v1159, 7
        %v1225 = vrot.slane %v1224, 2
        %v1226 = vrot.slane %v1161, 7
        %v1227 = vrot.slane %v1226, 2
        %v1228 = vrot.slane %v1169, 7
        %v1229 = vrot.slane %v1228, 2
        %v1230 = vrot.slane %v1177, 7
        %v1231 = vrot.slane %v1230, 2
        %v1232 = vrot.slane %v1176, 7
        %v1233 = vrot.slane %v1232, 2
        %v1234 = vrot.slane %v1178, 7
        %v1235 = vrot.slane %v1234, 2
        %v1236 = vrot.slane %v1186, 7
        %v1237 = vrot.slane %v1236, 2
        %v1238 = vrot.slane %v1194, 7
        %v1239 = vrot.slane %v1238, 2
        %v1240 = vrot.slane %v1193, 7
        %v1241 = vrot.slane %v1240, 2
        %v1242 = vrot.slane %v1195, 7
        %v1243 = vrot.slane %v1242, 2
        %v1260 = vmax.f32 %v1135, %v1213
        %v1261 = vmax.f32 %v1143, %v1215
        %v1262 = vmax.f32 %v1142, %v1217
        %v1263 = vmax.f32 %v1144, %v1219
        %v1264 = vmax.f32 %v1152, %v1221
        %v1265 = vmax.f32 %v1160, %v1223
        %v1266 = vmax.f32 %v1159, %v1225
        %v1267 = vmax.f32 %v1161, %v1227
        %v1268 = vmax.f32 %v1169, %v1229
        %v1269 = vmax.f32 %v1177, %v1231
        %v1270 = vmax.f32 %v1176, %v1233
        %v1271 = vmax.f32 %v1178, %v1235
        %v1272 = vmax.f32 %v1186, %v1237
        %v1273 = vmax.f32 %v1194, %v1239
        %v1274 = vmax.f32 %v1193, %v1241
        %v1275 = vmax.f32 %v1195, %v1243
        %v1292 = vlaneseq
        %v1293 = vshrl.u32 %v1292, 7
        %v1294 = vsub.s32 0, %v1293
        %v1295 = vrot.slane %v1260, %v1294
        %v1296 = vlaneseq
        %v1297 = vshrl.u32 %v1296, 7
        %v1298 = vsub.s32 0, %v1297
        %v1299 = vrot.slane %v1261, %v1298
        %v1300 = vlaneseq
        %v1301 = vshrl.u32 %v1300, 7
        %v1302 = vsub.s32 0, %v1301
        %v1303 = vrot.slane %v1262, %v1302
        %v1304 = vlaneseq
        %v1305 = vshrl.u32 %v1304, 7
        %v1306 = vsub.s32 0, %v1305
        %v1307 = vrot.slane %v1263, %v1306
        %v1308 = vlaneseq
        %v1309 = vshrl.u32 %v1308, 7
        %v1310 = vsub.s32 0, %v1309
        %v1311 = vrot.slane %v1264, %v1310
        %v1312 = vlaneseq
        %v1313 = vshrl.u32 %v1312, 7
        %v1314 = vsub.s32 0, %v1313
        %v1315 = vrot.slane %v1265, %v1314
        %v1316 = vlaneseq
        %v1317 = vshrl.u32 %v1316, 7
        %v1318 = vsub.s32 0, %v1317
        %v1319 = vrot.slane %v1266, %v1318
        %v1320 = vlaneseq
        %v1321 = vshrl.u32 %v1320, 7
        %v1322 = vsub.s32 0, %v1321
        %v1323 = vrot.slane %v1267, %v1322
        %v1324 = vlaneseq
        %v1325 = vshrl.u32 %v1324, 7
        %v1326 = vsub.s32 0, %v1325
        %v1327 = vrot.slane %v1268, %v1326
        %v1328 = vlaneseq
        %v1329 = vshrl.u32 %v1328, 7
        %v1330 = vsub.s32 0, %v1329
        %v1331 = vrot.slane %v1269, %v1330
        %v1332 = vlaneseq
        %v1333 = vshrl.u32 %v1332, 7
        %v1334 = vsub.s32 0, %v1333
        %v1335 = vrot.slane %v1270, %v1334
        %v1336 = vlaneseq
        %v1337 = vshrl.u32 %v1336, 7
        %v1338 = vsub.s32 0, %v1337
        %v1339 = vrot.slane %v1271, %v1338
        %v1340 = vlaneseq
        %v1341 = vshrl.u32 %v1340, 7
        %v1342 = vsub.s32 0, %v1341
        %v1343 = vrot.slane %v1272, %v1342
        %v1344 = vlaneseq
        %v1345 = vshrl.u32 %v1344, 7
        %v1346 = vsub.s32 0, %v1345
        %v1347 = vrot.slane %v1273, %v1346
        %v1348 = vlaneseq
        %v1349 = vshrl.u32 %v1348, 7
        %v1350 = vsub.s32 0, %v1349
        %v1351 = vrot.slane %v1274, %v1350
        %v1352 = vlaneseq
        %v1353 = vshrl.u32 %v1352, 7
        %v1354 = vsub.s32 0, %v1353
        %v1355 = vrot.slane %v1275, %v1354
        %v1356 = vsel %vm771, %v1299, %v1295
        %v1357 = vsel %vm773, %v1303, %v1356
        %v1358 = vsel %vm775, %v1307, %v1357
        %v1359 = vsel %vm777, %v1311, %v1358
        %v1360 = vsel %vm779, %v1315, %v1359
        %v1361 = vsel %vm781, %v1319, %v1360
        %v1362 = vsel %vm783, %v1323, %v1361
        %v1363 = vsel %vm771, %v1331, %v1327
        %v1364 = vsel %vm773, %v1335, %v1363
        %v1365 = vsel %vm775, %v1339, %v1364
        %v1366 = vsel %vm777, %v1343, %v1365
        %v1367 = vsel %vm779, %v1347, %v1366
        %v1368 = vsel %vm781, %v1351, %v1367
        %v1369 = vsel %vm783, %v1355, %v1368
        %s1372 = scalar_lea.vmem [#allocation2], 96
        %1373 = vst.msk [vmem:[%s1372 + $0x1] sm:$0xff] %vm811, %v1362
        %1374 = vst.msk [vmem:[%s1372 + $0x11] sm:$0xff] %vm811, %v1369
      $region56: #{down_forward.1} parent=39 // pred_fallthru
        _
      %v1375 = vld [vmem:[#allocation2] sm:$0xff]
      %v1376 = vld [vmem:[#allocation2 + $0x10] sm:$0xff]
      %v1377 = vld [vmem:[#allocation2 + $0x20] sm:$0xff]
      %v1378 = vld [vmem:[#allocation2 + $0x30] sm:$0xff]
      %v1379 = vld [vmem:[#allocation2 + $0x40] sm:$0xff]
      %v1380 = vld [vmem:[#allocation2 + $0x50] sm:$0xff]
      %v1381 = vld [vmem:[#allocation2 + $0x1] sm:$0xff]
      %v1382 = vld [vmem:[#allocation2 + $0x11] sm:$0xff]
      %v1383 = vld [vmem:[#allocation2 + $0x21] sm:$0xff]
      %v1384 = vld [vmem:[#allocation2 + $0x31] sm:$0xff]
      %v1385 = vld [vmem:[#allocation2 + $0x41] sm:$0xff]
      %v1386 = vld [vmem:[#allocation2 + $0x51] sm:$0xff]
      %v1387 = vld [vmem:[#allocation2 + $0x2] sm:$0xff]
      %v1388 = vld [vmem:[#allocation2 + $0x12] sm:$0xff]
      %v1389 = vld [vmem:[#allocation2 + $0x22] sm:$0xff]
      %v1390 = vld [vmem:[#allocation2 + $0x32] sm:$0xff]
      %v1391 = vld [vmem:[#allocation2 + $0x42] sm:$0xff]
      %v1392 = vld [vmem:[#allocation2 + $0x52] sm:$0xff]
      %s1393 = scalar_lea.vmem [#allocation2], 16
      %v1394 = vld [vmem:[%s1393] sm:$0xff]
      %v1395 = vld [vmem:[%s1393 + $0x10] sm:$0xff]
      %v1396 = vld [vmem:[%s1393 + $0x20] sm:$0xff]
      %v1397 = vld [vmem:[%s1393 + $0x30] sm:$0xff]
      %v1398 = vld [vmem:[%s1393 + $0x40] sm:$0xff]
      %v1399 = vld [vmem:[%s1393 + $0x50] sm:$0xff]
      %v1400 = vld [vmem:[%s1393 + $0x1] sm:$0xff]
      %v1401 = vld [vmem:[%s1393 + $0x11] sm:$0xff]
      %v1402 = vld [vmem:[%s1393 + $0x21] sm:$0xff]
      %v1403 = vld [vmem:[%s1393 + $0x31] sm:$0xff]
      %v1404 = vld [vmem:[%s1393 + $0x41] sm:$0xff]
      %v1405 = vld [vmem:[%s1393 + $0x51] sm:$0xff]
      %v1406 = vld [vmem:[%s1393 + $0x2] sm:$0xff]
      %v1407 = vld [vmem:[%s1393 + $0x12] sm:$0xff]
      %v1408 = vld [vmem:[%s1393 + $0x22] sm:$0xff]
      %v1409 = vld [vmem:[%s1393 + $0x32] sm:$0xff]
      %v1410 = vld [vmem:[%s1393 + $0x42] sm:$0xff]
      %v1411 = vld [vmem:[%s1393 + $0x52] sm:$0xff]
      %v1412 = vld [vmem:[%s810] sm:$0xff]
      %v1413 = vld [vmem:[%s810 + $0x10] sm:$0xff]
      %v1414 = vld [vmem:[%s810 + $0x20] sm:$0xff]
      %v1415 = vld [vmem:[%s810 + $0x30] sm:$0xff]
      %v1416 = vld [vmem:[%s810 + $0x40] sm:$0xff]
      %v1417 = vld [vmem:[%s810 + $0x50] sm:$0xff]
      %v1418 = vld [vmem:[%s810 + $0x1] sm:$0xff]
      %v1419 = vld [vmem:[%s810 + $0x11] sm:$0xff]
      %v1420 = vld [vmem:[%s810 + $0x21] sm:$0xff]
      %v1421 = vld [vmem:[%s810 + $0x31] sm:$0xff]
      %v1422 = vld [vmem:[%s810 + $0x41] sm:$0xff]
      %v1423 = vld [vmem:[%s810 + $0x51] sm:$0xff]
      %v1424 = vld [vmem:[%s810 + $0x2] sm:$0xff]
      %v1425 = vld [vmem:[%s810 + $0x12] sm:$0xff]
      %v1426 = vld [vmem:[%s810 + $0x22] sm:$0xff]
      %v1427 = vld [vmem:[%s810 + $0x32] sm:$0xff]
      %v1428 = vld [vmem:[%s810 + $0x42] sm:$0xff]
      %v1429 = vld [vmem:[%s810 + $0x52] sm:$0xff]
      %1436 = vrot.lane.b32.xlu0 %v1381, 4
      %v1437 = vpop.permute.xlu0 %1436
      %1438 = vrot.lane.b32.xlu0 %v1382, 4
      %v1439 = vpop.permute.xlu0 %1438
      %1440 = vrot.lane.b32.xlu0 %v1383, 4
      %v1441 = vpop.permute.xlu0 %1440
      %1442 = vrot.lane.b32.xlu0 %v1384, 4
      %v1443 = vpop.permute.xlu0 %1442
      %1444 = vrot.lane.b32.xlu0 %v1385, 4
      %v1445 = vpop.permute.xlu0 %1444
      %1446 = vrot.lane.b32.xlu0 %v1386, 4
      %v1447 = vpop.permute.xlu0 %1446
      %1460 = vrot.lane.b32.xlu0 %v1387, 8
      %v1461 = vpop.permute.xlu0 %1460
      %1462 = vrot.lane.b32.xlu0 %v1388, 8
      %v1463 = vpop.permute.xlu0 %1462
      %1464 = vrot.lane.b32.xlu0 %v1389, 8
      %v1465 = vpop.permute.xlu0 %1464
      %1466 = vrot.lane.b32.xlu0 %v1390, 8
      %v1467 = vpop.permute.xlu0 %1466
      %1468 = vrot.lane.b32.xlu0 %v1391, 8
      %v1469 = vpop.permute.xlu0 %1468
      %1470 = vrot.lane.b32.xlu0 %v1392, 8
      %v1471 = vpop.permute.xlu0 %1470
      %1484 = vrot.lane.b32.xlu0 %v1394, 12
      %v1485 = vpop.permute.xlu0 %1484
      %1486 = vrot.lane.b32.xlu0 %v1395, 12
      %v1487 = vpop.permute.xlu0 %1486
      %1488 = vrot.lane.b32.xlu0 %v1396, 12
      %v1489 = vpop.permute.xlu0 %1488
      %1490 = vrot.lane.b32.xlu0 %v1397, 12
      %v1491 = vpop.permute.xlu0 %1490
      %1492 = vrot.lane.b32.xlu0 %v1398, 12
      %v1493 = vpop.permute.xlu0 %1492
      %1494 = vrot.lane.b32.xlu0 %v1399, 12
      %v1495 = vpop.permute.xlu0 %1494
      %1508 = vrot.lane.b32.xlu0 %v1400, 16
      %v1509 = vpop.permute.xlu0 %1508
      %1510 = vrot.lane.b32.xlu0 %v1401, 16
      %v1511 = vpop.permute.xlu0 %1510
      %1512 = vrot.lane.b32.xlu0 %v1402, 16
      %v1513 = vpop.permute.xlu0 %1512
      %1514 = vrot.lane.b32.xlu0 %v1403, 16
      %v1515 = vpop.permute.xlu0 %1514
      %1516 = vrot.lane.b32.xlu0 %v1404, 16
      %v1517 = vpop.permute.xlu0 %1516
      %1518 = vrot.lane.b32.xlu0 %v1405, 16
      %v1519 = vpop.permute.xlu0 %1518
      %1532 = vrot.lane.b32.xlu0 %v1406, 20
      %v1533 = vpop.permute.xlu0 %1532
      %1534 = vrot.lane.b32.xlu0 %v1407, 20
      %v1535 = vpop.permute.xlu0 %1534
      %1536 = vrot.lane.b32.xlu0 %v1408, 20
      %v1537 = vpop.permute.xlu0 %1536
      %1538 = vrot.lane.b32.xlu0 %v1409, 20
      %v1539 = vpop.permute.xlu0 %1538
      %1540 = vrot.lane.b32.xlu0 %v1410, 20
      %v1541 = vpop.permute.xlu0 %1540
      %1542 = vrot.lane.b32.xlu0 %v1411, 20
      %v1543 = vpop.permute.xlu0 %1542
      %1556 = vrot.lane.b32.xlu0 %v1412, 24
      %v1557 = vpop.permute.xlu0 %1556
      %1558 = vrot.lane.b32.xlu0 %v1413, 24
      %v1559 = vpop.permute.xlu0 %1558
      %1560 = vrot.lane.b32.xlu0 %v1414, 24
      %v1561 = vpop.permute.xlu0 %1560
      %1562 = vrot.lane.b32.xlu0 %v1415, 24
      %v1563 = vpop.permute.xlu0 %1562
      %1564 = vrot.lane.b32.xlu0 %v1416, 24
      %v1565 = vpop.permute.xlu0 %1564
      %1566 = vrot.lane.b32.xlu0 %v1417, 24
      %v1567 = vpop.permute.xlu0 %1566
      %1580 = vrot.lane.b32.xlu0 %v1418, 28
      %v1581 = vpop.permute.xlu0 %1580
      %1582 = vrot.lane.b32.xlu0 %v1419, 28
      %v1583 = vpop.permute.xlu0 %1582
      %1584 = vrot.lane.b32.xlu0 %v1420, 28
      %v1585 = vpop.permute.xlu0 %1584
      %1586 = vrot.lane.b32.xlu0 %v1421, 28
      %v1587 = vpop.permute.xlu0 %1586
      %1588 = vrot.lane.b32.xlu0 %v1422, 28
      %v1589 = vpop.permute.xlu0 %1588
      %1590 = vrot.lane.b32.xlu0 %v1423, 28
      %v1591 = vpop.permute.xlu0 %1590
      %1604 = vrot.lane.b32.xlu0 %v1424, 32
      %v1605 = vpop.permute.xlu0 %1604
      %1606 = vrot.lane.b32.xlu0 %v1425, 32
      %v1607 = vpop.permute.xlu0 %1606
      %1608 = vrot.lane.b32.xlu0 %v1426, 32
      %v1609 = vpop.permute.xlu0 %1608
      %1610 = vrot.lane.b32.xlu0 %v1427, 32
      %v1611 = vpop.permute.xlu0 %1610
      %1612 = vrot.lane.b32.xlu0 %v1428, 32
      %v1613 = vpop.permute.xlu0 %1612
      %1614 = vrot.lane.b32.xlu0 %v1429, 32
      %v1615 = vpop.permute.xlu0 %1614
      %v1622 = vsel %vm811, %v1375, %v1437
      %v1623 = vsel %vm811, %v1376, %v1439
      %v1624 = vsel %vm811, %v1377, %v1441
      %v1625 = vsel %vm811, %v1378, %v1443
      %v1626 = vsel %vm811, %v1379, %v1445
      %v1627 = vsel %vm811, %v1380, %v1447
      %vm1628 = vcmask 64512
      %v1629 = vsel %vm1628, %v1622, %v1461
      %v1630 = vsel %vm1628, %v1623, %v1463
      %v1631 = vsel %vm1628, %v1624, %v1465
      %v1632 = vsel %vm1628, %v1625, %v1467
      %v1633 = vsel %vm1628, %v1626, %v1469
      %v1634 = vsel %vm1628, %v1627, %v1471
      %vm1635 = vcmask 97280
      %v1636 = vsel %vm1635, %v1629, %v1485
      %v1637 = vsel %vm1635, %v1630, %v1487
      %v1638 = vsel %vm1635, %v1631, %v1489
      %v1639 = vsel %vm1635, %v1632, %v1491
      %v1640 = vsel %vm1635, %v1633, %v1493
      %v1641 = vsel %vm1635, %v1634, %v1495
      %vm1642 = vcmask 130048
      %v1643 = vsel %vm1642, %v1636, %v1509
      %v1644 = vsel %vm1642, %v1637, %v1511
      %v1645 = vsel %vm1642, %v1638, %v1513
      %v1646 = vsel %vm1642, %v1639, %v1515
      %v1647 = vsel %vm1642, %v1640, %v1517
      %v1648 = vsel %vm1642, %v1641, %v1519
      %vm1649 = vcmask 162816
      %v1650 = vsel %vm1649, %v1643, %v1533
      %v1651 = vsel %vm1649, %v1644, %v1535
      %v1652 = vsel %vm1649, %v1645, %v1537
      %v1653 = vsel %vm1649, %v1646, %v1539
      %v1654 = vsel %vm1649, %v1647, %v1541
      %v1655 = vsel %vm1649, %v1648, %v1543
      %vm1656 = vcmask 195584
      %v1657 = vsel %vm1656, %v1650, %v1557
      %v1658 = vsel %vm1656, %v1651, %v1559
      %v1659 = vsel %vm1656, %v1652, %v1561
      %v1660 = vsel %vm1656, %v1653, %v1563
      %v1661 = vsel %vm1656, %v1654, %v1565
      %v1662 = vsel %vm1656, %v1655, %v1567
      %vm1663 = vcmask 228352
      %v1664 = vsel %vm1663, %v1657, %v1581
      %v1665 = vsel %vm1663, %v1658, %v1583
      %v1666 = vsel %vm1663, %v1659, %v1585
      %v1667 = vsel %vm1663, %v1660, %v1587
      %v1668 = vsel %vm1663, %v1661, %v1589
      %v1669 = vsel %vm1663, %v1662, %v1591
      %vm1670 = vcmask 261120
      %v1671 = vsel %vm1670, %v1664, %v1605
      %v1672 = vsel %vm1670, %v1665, %v1607
      %v1673 = vsel %vm1670, %v1666, %v1609
      %v1674 = vsel %vm1670, %v1667, %v1611
      %v1675 = vsel %vm1670, %v1668, %v1613
      %v1676 = vsel %vm1670, %v1669, %v1615
      %v1677 = vpack.c.bf16 %v1672, %v1671
      %v1678 = vpack.c.bf16 %v1674, %v1673
      %v1679 = vpack.c.bf16 %v1676, %v1675
      %v1680 = vld [vmem:[%s1] sm:$0xf]
      %v1681 = vld [vmem:[%s1 + $0x4] sm:$0xf]
      %v1682 = vld [vmem:[%s1 + $0x8] sm:$0xf]
      %v1683 = vld [vmem:[%s1 + $0xc] sm:$0xf]
      %v1684 = vld [vmem:[%s1 + $0x10] sm:$0x3]
      %v1685 = vld [vmem:[%s2] sm:$0x1]
      %v1687 = vlaneseq
      %v1688 = vshrl.u32 %v1687, 7
      %v1689 = vsub.s32 0, %v1688
      %v1690 = vrot.slane %v1685, %v1689
      %v1697 = vunpack.c.l.b16 %v1680
      %v1698 = vunpack.c.l.b16 %v1681
      %v1699 = vunpack.c.l.b16 %v1682
      %v1700 = vunpack.c.l.b16 %v1683
      %v1701 = vunpack.c.l.b16 %v1684
      %v1702 = vpack.c.b16 %v1698, %v1697
      %v1703 = vpack.c.b16 %v1700, %v1699
      %v1704 = vpack.c.b16 %v1701, %v1701
      %vm1707 = vcmask 293888
      %v1709 = vsel %vm1707, %v1677, 0
      %v1712 = vsel %vm1707, %v1678, 0
      %v1715 = vsel %vm1707, %v1679, 0
      %vm1717 = vcmask 1041408
      %v1719 = vsel %vm1717, %v1704, 0
      %1721 = vmatprep.subr.bf16.mxu0 0
      %1722 = vmatpush1.bf16.msra.mxu0 0
      %1723 = vmatprep.subr.bf16.mxu0 0
      %1724 = vmatpush1.bf16.msra.mxu0 0
      %1725 = vmatprep.subr.bf16.mxu0 0
      %1726 = vmatpush1.bf16.msra.mxu0 0
      %1727 = vmatprep.subr.bf16.mxu0 0
      %1728 = vmatpush1.bf16.msra.mxu0 0
      %1729 = vmatprep.subr.bf16.mxu0 0
      %1730 = vmatpush1.bf16.msra.mxu0 0
      %1731 = vmatprep.subr.bf16.mxu0 0
      %1732 = vmatpush1.bf16.msra.mxu0 %v1719
      %1733 = vmatprep.subr.bf16.mxu0 0
      %1734 = vmatpush1.bf16.msra.mxu0 %v1703
      %1735 = vmatprep.subr.bf16.mxu0 0
      %1736 = vmatpush1.bf16.msra.mxu0 %v1702
      %1737 = vmatprep.subr.bf16.mxu0 0
      %1738 = vmatpush2.bf16.msra.mxu0 0
      %1739 = vmatprep.subr.bf16.mxu0 0
      %1740 = vmatpush2.bf16.msra.mxu0 0
      %1741 = vmatprep.subr.bf16.mxu0 0
      %1742 = vmatpush2.bf16.msra.mxu0 0
      %1743 = vmatprep.subr.bf16.mxu0 0
      %1744 = vmatpush2.bf16.msra.mxu0 0
      %1745 = vmatprep.subr.bf16.mxu0 0
      %1746 = vmatpush2.bf16.msra.mxu0 0
      %1747 = vmatprep.subr.bf16.mxu0 0
      %1748 = vmatpush2.bf16.msra.mxu0 0
      %1749 = vmatprep.subr.bf16.mxu0 0
      %1750 = vmatpush2.bf16.msra.mxu0 0
      %1751 = vmatprep.subr.bf16.mxu0 0
      %1752 = vmatpush2.bf16.msra.mxu0 0
      %1753 = vmatprep.mubr.bf16.mxu0 0
      %1754 = vmatmul.mubr.bf16.gmra.mxu0 %v1709
      %v1755 = vpop.f32.mrf.mxu0
      %v1756 = vadd.f32 %v1690, %v1755
      %v1757 = vpop.f32.mrf.mxu0
      %v1758 = vpop.f32.mrf.mxu0
      %v1759 = vadd.f32 %v1690, %v1758
      %v1760 = vpop.f32.mrf.mxu0
      %1761 = vmatprep.mubr.bf16.mxu0 0
      %1762 = vmatmul.mubr.bf16.gmra.mxu0 %v1712
      %v1763 = vpop.f32.mrf.mxu0
      %v1764 = vadd.f32 %v1690, %v1763
      %v1765 = vpop.f32.mrf.mxu0
      %v1766 = vpop.f32.mrf.mxu0
      %v1767 = vadd.f32 %v1690, %v1766
      %v1768 = vpop.f32.mrf.mxu0
      %1769 = vmatprep.mubr.bf16.mxu0 0
      %1770 = vmatmul.mubr.bf16.gmra.mxu0 %v1715
      %v1771 = vpop.f32.mrf.mxu0
      %v1772 = vadd.f32 %v1690, %v1771
      %v1773 = vpop.f32.mrf.mxu0
      %v1774 = vpop.f32.mrf.mxu0
      %v1775 = vadd.f32 %v1690, %v1774
      %v1776 = vpop.f32.mrf.mxu0
      %1777 = vdwg.mxu0
      %v1778 = vmax.f32 %v1756, 0.0
      %v1779 = vmax.f32 %v1759, 0.0
      %v1780 = vmax.f32 %v1764, 0.0
      %v1781 = vmax.f32 %v1767, 0.0
      %v1782 = vmax.f32 %v1772, 0.0
      %v1783 = vmax.f32 %v1775, 0.0
      %1784 = vst.msk [vmem:[#allocation3 + $0x1] sm:$0xff] %vm1628, %v1778
      %1785 = vst.msk [vmem:[#allocation3 + $0x11] sm:$0xff] %vm1628, %v1779
      %1786 = vst.msk [vmem:[#allocation3 + $0x21] sm:$0xff] %vm1628, %v1780
      %1787 = vst.msk [vmem:[#allocation3 + $0x31] sm:$0xff] %vm1628, %v1781
      %1788 = vst.msk [vmem:[#allocation3 + $0x41] sm:$0xff] %vm1628, %v1782
      %1789 = vst.msk [vmem:[#allocation3 + $0x51] sm:$0xff] %vm1628, %v1783
      // Predicated region
      $region57: #{down_forward.1} parent=39 // pred_check
        %p1790 = pneg %p816
      $region58: #{down_forward.1} parent=39 // pred_check_branch
        %1792 = sbr.rel (%p1790) target = $region60
      $region59: #{down_forward.1} parent=39 // pred_region
        %1793 = vst.msk [vmem:[#allocation3] sm:$0xff] %vm1628, 0.0
        %vm1794 = vcmask 58368
        %1795 = vst.msk [vmem:[#allocation3 + $0x8] sm:$0x3] %vm1794, 0.0
      $region60: #{down_forward.1} parent=39 // pred_fallthru
        _
      // Predicated region
      $region61: #{down_forward.1} parent=39 // pred_check
        %p1796 = pneg %p1094
      $region62: #{down_forward.1} parent=39 // pred_check_branch
        %1798 = sbr.rel (%p1796) target = $region64
      $region63: #{down_forward.1} parent=39 // pred_region
        %s1799 = scalar_lea.vmem [#allocation3], 80
        %1800 = vst.msk [vmem:[%s1799] sm:$0xff] %vm1628, 0.0
        %vm1801 = vcmask 58368
        %1802 = vst.msk [vmem:[%s1799 + $0x8] sm:$0x3] %vm1801, 0.0
      $region64: #{down_forward.1} parent=39 // pred_fallthru
        _
      %v1803 = vld [vmem:[#allocation3] sm:$0xff]
      %v1804 = vld [vmem:[#allocation3 + $0x10] sm:$0xff]
      %v1805 = vld [vmem:[#allocation3 + $0x20] sm:$0xff]
      %v1806 = vld [vmem:[#allocation3 + $0x30] sm:$0xff]
      %v1807 = vld [vmem:[#allocation3 + $0x1] sm:$0xff]
      %v1808 = vld [vmem:[#allocation3 + $0x11] sm:$0xff]
      %v1809 = vld [vmem:[#allocation3 + $0x21] sm:$0xff]
      %v1810 = vld [vmem:[#allocation3 + $0x31] sm:$0xff]
      %v1811 = vld [vmem:[#allocation3 + $0x2] sm:$0xff]
      %v1812 = vld [vmem:[#allocation3 + $0x12] sm:$0xff]
      %v1813 = vld [vmem:[#allocation3 + $0x22] sm:$0xff]
      %v1814 = vld [vmem:[#allocation3 + $0x32] sm:$0xff]
      %s1815 = scalar_lea.vmem [#allocation3], 16
      %v1816 = vld [vmem:[%s1815] sm:$0xff]
      %v1817 = vld [vmem:[%s1815 + $0x10] sm:$0xff]
      %v1818 = vld [vmem:[%s1815 + $0x20] sm:$0xff]
      %v1819 = vld [vmem:[%s1815 + $0x30] sm:$0xff]
      %v1820 = vld [vmem:[%s1815 + $0x1] sm:$0xff]
      %v1821 = vld [vmem:[%s1815 + $0x11] sm:$0xff]
      %v1822 = vld [vmem:[%s1815 + $0x21] sm:$0xff]
      %v1823 = vld [vmem:[%s1815 + $0x31] sm:$0xff]
      %v1824 = vld [vmem:[%s1815 + $0x2] sm:$0xff]
      %v1825 = vld [vmem:[%s1815 + $0x12] sm:$0xff]
      %v1826 = vld [vmem:[%s1815 + $0x22] sm:$0xff]
      %v1827 = vld [vmem:[%s1815 + $0x32] sm:$0xff]
      %s1828 = scalar_lea.vmem [#allocation3], 32
      %v1829 = vld [vmem:[%s1828] sm:$0xff]
      %v1830 = vld [vmem:[%s1828 + $0x10] sm:$0xff]
      %v1831 = vld [vmem:[%s1828 + $0x20] sm:$0xff]
      %v1832 = vld [vmem:[%s1828 + $0x30] sm:$0xff]
      %v1833 = vld [vmem:[%s1828 + $0x1] sm:$0xff]
      %v1834 = vld [vmem:[%s1828 + $0x11] sm:$0xff]
      %v1835 = vld [vmem:[%s1828 + $0x21] sm:$0xff]
      %v1836 = vld [vmem:[%s1828 + $0x31] sm:$0xff]
      %v1837 = vld [vmem:[%s1828 + $0x2] sm:$0xff]
      %v1838 = vld [vmem:[%s1828 + $0x12] sm:$0xff]
      %v1839 = vld [vmem:[%s1828 + $0x22] sm:$0xff]
      %v1840 = vld [vmem:[%s1828 + $0x32] sm:$0xff]
      %1845 = vrot.lane.b32.xlu0 %v1807, 8
      %v1846 = vpop.permute.xlu0 %1845
      %1847 = vrot.lane.b32.xlu0 %v1808, 8
      %v1848 = vpop.permute.xlu0 %1847
      %1849 = vrot.lane.b32.xlu0 %v1809, 8
      %v1850 = vpop.permute.xlu0 %1849
      %1851 = vrot.lane.b32.xlu0 %v1810, 8
      %v1852 = vpop.permute.xlu0 %1851
      %1861 = vrot.lane.b32.xlu0 %v1811, 16
      %v1862 = vpop.permute.xlu0 %1861
      %1863 = vrot.lane.b32.xlu0 %v1812, 16
      %v1864 = vpop.permute.xlu0 %1863
      %1865 = vrot.lane.b32.xlu0 %v1813, 16
      %v1866 = vpop.permute.xlu0 %1865
      %1867 = vrot.lane.b32.xlu0 %v1814, 16
      %v1868 = vpop.permute.xlu0 %1867
      %1877 = vrot.lane.b32.xlu0 %v1816, 24
      %v1878 = vpop.permute.xlu0 %1877
      %1879 = vrot.lane.b32.xlu0 %v1817, 24
      %v1880 = vpop.permute.xlu0 %1879
      %1881 = vrot.lane.b32.xlu0 %v1818, 24
      %v1882 = vpop.permute.xlu0 %1881
      %1883 = vrot.lane.b32.xlu0 %v1819, 24
      %v1884 = vpop.permute.xlu0 %1883
      %1893 = vrot.lane.b32.xlu0 %v1820, 32
      %v1894 = vpop.permute.xlu0 %1893
      %1895 = vrot.lane.b32.xlu0 %v1821, 32
      %v1896 = vpop.permute.xlu0 %1895
      %1897 = vrot.lane.b32.xlu0 %v1822, 32
      %v1898 = vpop.permute.xlu0 %1897
      %1899 = vrot.lane.b32.xlu0 %v1823, 32
      %v1900 = vpop.permute.xlu0 %1899
      %1909 = vrot.lane.b32.xlu0 %v1824, 40
      %v1910 = vpop.permute.xlu0 %1909
      %1911 = vrot.lane.b32.xlu0 %v1825, 40
      %v1912 = vpop.permute.xlu0 %1911
      %1913 = vrot.lane.b32.xlu0 %v1826, 40
      %v1914 = vpop.permute.xlu0 %1913
      %1915 = vrot.lane.b32.xlu0 %v1827, 40
      %v1916 = vpop.permute.xlu0 %1915
      %1925 = vrot.lane.b32.xlu0 %v1829, 48
      %v1926 = vpop.permute.xlu0 %1925
      %1927 = vrot.lane.b32.xlu0 %v1830, 48
      %v1928 = vpop.permute.xlu0 %1927
      %1929 = vrot.lane.b32.xlu0 %v1831, 48
      %v1930 = vpop.permute.xlu0 %1929
      %1931 = vrot.lane.b32.xlu0 %v1832, 48
      %v1932 = vpop.permute.xlu0 %1931
      %1941 = vrot.lane.b32.xlu0 %v1833, 56
      %v1942 = vpop.permute.xlu0 %1941
      %1943 = vrot.lane.b32.xlu0 %v1834, 56
      %v1944 = vpop.permute.xlu0 %1943
      %1945 = vrot.lane.b32.xlu0 %v1835, 56
      %v1946 = vpop.permute.xlu0 %1945
      %1947 = vrot.lane.b32.xlu0 %v1836, 56
      %v1948 = vpop.permute.xlu0 %1947
      %1957 = vrot.lane.b32.xlu0 %v1837, 64
      %v1958 = vpop.permute.xlu0 %1957
      %1959 = vrot.lane.b32.xlu0 %v1838, 64
      %v1960 = vpop.permute.xlu0 %1959
      %1961 = vrot.lane.b32.xlu0 %v1839, 64
      %v1962 = vpop.permute.xlu0 %1961
      %1963 = vrot.lane.b32.xlu0 %v1840, 64
      %v1964 = vpop.permute.xlu0 %1963
      %v1969 = vsel %vm1628, %v1803, %v1846
      %v1970 = vsel %vm1628, %v1804, %v1848
      %v1971 = vsel %vm1628, %v1805, %v1850
      %v1972 = vsel %vm1628, %v1806, %v1852
      %v1973 = vsel %vm1642, %v1969, %v1862
      %v1974 = vsel %vm1642, %v1970, %v1864
      %v1975 = vsel %vm1642, %v1971, %v1866
      %v1976 = vsel %vm1642, %v1972, %v1868
      %v1977 = vsel %vm1656, %v1973, %v1878
      %v1978 = vsel %vm1656, %v1974, %v1880
      %v1979 = vsel %vm1656, %v1975, %v1882
      %v1980 = vsel %vm1656, %v1976, %v1884
      %v1981 = vsel %vm1670, %v1977, %v1894
      %v1982 = vsel %vm1670, %v1978, %v1896
      %v1983 = vsel %vm1670, %v1979, %v1898
      %v1984 = vsel %vm1670, %v1980, %v1900
      %vm1985 = vcmask 326656
      %v1986 = vsel %vm1985, %v1981, %v1910
      %v1987 = vsel %vm1985, %v1982, %v1912
      %v1988 = vsel %vm1985, %v1983, %v1914
      %v1989 = vsel %vm1985, %v1984, %v1916
      %vm1990 = vcmask 392192
      %v1991 = vsel %vm1990, %v1986, %v1926
      %v1992 = vsel %vm1990, %v1987, %v1928
      %v1993 = vsel %vm1990, %v1988, %v1930
      %v1994 = vsel %vm1990, %v1989, %v1932
      %vm1995 = vcmask 457728
      %v1996 = vsel %vm1995, %v1991, %v1942
      %v1997 = vsel %vm1995, %v1992, %v1944
      %v1998 = vsel %vm1995, %v1993, %v1946
      %v1999 = vsel %vm1995, %v1994, %v1948
      %vm2000 = vcmask 523264
      %v2001 = vsel %vm2000, %v1996, %v1958
      %v2002 = vsel %vm2000, %v1997, %v1960
      %v2003 = vsel %vm2000, %v1998, %v1962
      %v2004 = vsel %vm2000, %v1999, %v1964
      %v2005 = vpack.c.bf16 %v2002, %v2001
      %v2006 = vpack.c.bf16 %v2004, %v2003
      %v2007 = vld [vmem:[%s3] sm:$0xf]
      %v2008 = vld [vmem:[%s3 + $0x4] sm:$0xf]
      %v2009 = vld [vmem:[%s3 + $0x8] sm:$0xf]
      %v2010 = vld [vmem:[%s3 + $0xc] sm:$0xf]
      %v2011 = vld [vmem:[%s3 + $0x10] sm:$0xf]
      %v2012 = vld [vmem:[%s3 + $0x14] sm:$0xf]
      %v2013 = vld [vmem:[%s3 + $0x18] sm:$0xf]
      %v2014 = vld [vmem:[%s3 + $0x1c] sm:$0xf]
      %v2015 = vld [vmem:[%s3 + $0x20] sm:$0xf]
      %v2016 = vld [vmem:[%s4] sm:$0x1]
      %v2018 = vlaneseq
      %v2019 = vshrl.u32 %v2018, 7
      %v2020 = vsub.s32 0, %v2019
      %v2021 = vrot.slane %v2016, %v2020
      %v2032 = vunpack.c.l.b16 %v2007
      %v2033 = vunpack.c.l.b16 %v2008
      %v2034 = vunpack.c.l.b16 %v2009
      %v2035 = vunpack.c.l.b16 %v2010
      %v2036 = vunpack.c.l.b16 %v2011
      %v2037 = vunpack.c.l.b16 %v2012
      %v2038 = vunpack.c.l.b16 %v2013
      %v2039 = vunpack.c.l.b16 %v2014
      %v2040 = vunpack.c.l.b16 %v2015
      %v2041 = vpack.c.b16 %v2033, %v2032
      %v2042 = vpack.c.b16 %v2035, %v2034
      %v2043 = vpack.c.b16 %v2037, %v2036
      %v2044 = vpack.c.b16 %v2039, %v2038
      %v2045 = vpack.c.b16 %v2040, %v2040
      %vm2050 = vcmask 588800
      %v2052 = vsel %vm2050, %v2005, 0
      %v2055 = vsel %vm2050, %v2006, 0
      %vm2057 = vcmask 1043456
      %v2059 = vsel %vm2057, %v2045, 0
      %2061 = vmatprep.subr.bf16.mxu0 0
      %2062 = vmatpush1.bf16.msra.mxu0 0
      %2063 = vmatprep.subr.bf16.mxu0 0
      %2064 = vmatpush1.bf16.msra.mxu0 0
      %2065 = vmatprep.subr.bf16.mxu0 0
      %2066 = vmatpush1.bf16.msra.mxu0 0
      %2067 = vmatprep.subr.bf16.mxu0 0
      %2068 = vmatpush1.bf16.msra.mxu0 %v2059
      %2069 = vmatprep.subr.bf16.mxu0 0
      %2070 = vmatpush1.bf16.msra.mxu0 %v2044
      %2071 = vmatprep.subr.bf16.mxu0 0
      %2072 = vmatpush1.bf16.msra.mxu0 %v2043
      %2073 = vmatprep.subr.bf16.mxu0 0
      %2074 = vmatpush1.bf16.msra.mxu0 %v2042
      %2075 = vmatprep.subr.bf16.mxu0 0
      %2076 = vmatpush1.bf16.msra.mxu0 %v2041
      %2077 = vmatprep.subr.bf16.mxu0 0
      %2078 = vmatpush2.bf16.msra.mxu0 0
      %2079 = vmatprep.subr.bf16.mxu0 0
      %2080 = vmatpush2.bf16.msra.mxu0 0
      %2081 = vmatprep.subr.bf16.mxu0 0
      %2082 = vmatpush2.bf16.msra.mxu0 0
      %2083 = vmatprep.subr.bf16.mxu0 0
      %2084 = vmatpush2.bf16.msra.mxu0 0
      %2085 = vmatprep.subr.bf16.mxu0 0
      %2086 = vmatpush2.bf16.msra.mxu0 0
      %2087 = vmatprep.subr.bf16.mxu0 0
      %2088 = vmatpush2.bf16.msra.mxu0 0
      %2089 = vmatprep.subr.bf16.mxu0 0
      %2090 = vmatpush2.bf16.msra.mxu0 0
      %2091 = vmatprep.subr.bf16.mxu0 0
      %2092 = vmatpush2.bf16.msra.mxu0 0
      %2093 = vmatprep.mubr.bf16.mxu0 0
      %2094 = vmatmul.mubr.bf16.gmra.mxu0 %v2052
      %v2095 = vpop.f32.mrf.mxu0
      %v2096 = vadd.f32 %v2021, %v2095
      %v2097 = vpop.f32.mrf.mxu0
      %v2098 = vpop.f32.mrf.mxu0
      %v2099 = vadd.f32 %v2021, %v2098
      %v2100 = vpop.f32.mrf.mxu0
      %2101 = vmatprep.mubr.bf16.mxu0 0
      %2102 = vmatmul.mubr.bf16.gmra.mxu0 %v2055
      %v2103 = vpop.f32.mrf.mxu0
      %v2104 = vadd.f32 %v2021, %v2103
      %v2105 = vpop.f32.mrf.mxu0
      %v2106 = vpop.f32.mrf.mxu0
      %v2107 = vadd.f32 %v2021, %v2106
      %v2108 = vpop.f32.mrf.mxu0
      %2109 = vdwg.mxu0
      %v2110 = vmax.f32 %v2096, 0.0
      %v2111 = vmax.f32 %v2099, 0.0
      %v2112 = vmax.f32 %v2104, 0.0
      %v2113 = vmax.f32 %v2107, 0.0
      %2114 = vst.msk [vmem:[%s246] sm:$0xff] %vm1628, %v2110
      %2115 = vst.msk [vmem:[%s246 + $0x8] sm:$0xff] %vm1628, %v2111
      %2116 = vst.msk [vmem:[%s246 + $0x10] sm:$0xff] %vm1628, %v2112
      %2117 = vst.msk [vmem:[%s246 + $0x18] sm:$0xff] %vm1628, %v2113
      %s2118 = smul.u32 4, %s21
      %p2119 = scmp.lt.s32.totalorder %s20, 1
      %s2120 = scalar_select %p2119, %s20, 1
      %p2121 = scmp.lt.s32.totalorder %s2118, 7
      %s2122 = scalar_select %p2121, %s2118, 7
      %s2123 = smul.addr %s2120, 8
      %s2124 = sadd.s32 %s2122, %s2123
      %s2125 = smul.addr %s2124, 8
      %s2126 = scalar_lea.vmem %s5, %s2125
      // Predicated region
      $region65: #{down_forward.1} parent=39 // pred_check
        %p2127 = pneg %p158
      $region66: #{down_forward.1} parent=39 // pred_check_branch
        %2129 = sbr.rel (%p2127) target = $region68
      $region67: #{down_forward.1} parent=39 // pred_region
        %s2130 = smul.u32 4, %s21
      $region68: #{down_forward.1} parent=39 // pred_fallthru
        _
    $region40: #{down_forward.1} parent=5 // pred_fallthru
      _
    %p2131 = scmp.le.s32.totalorder 2, %s11
    // Predicated region
    $region69: #{down_forward.1} parent=5 // pred_check
      %p2132 = pneg %p2131
    $region70: #{down_forward.1} parent=5 // pred_check_branch
      %2134 = sbr.rel (%p2132) target = $region72
    $region71: #{down_forward.1} parent=5 // pred_region
      %s2135 = ssub.s32 %s11, 2
      // Predicated region
      $region73: #{down_forward.1} parent=71 // pred_check
        %p2136 = pneg %p164
      $region74: #{down_forward.1} parent=71 // pred_check_branch
        %2138 = sbr.rel (%p2136) target = $region76
      $region75: #{down_forward.1} parent=71 // pred_region
        %s2139 = smul.u32 4, %s23
        %p2140 = scmp.lt.s32.totalorder %s22, 1
        %s2141 = scalar_select %p2140, %s22, 1
        %p2142 = scmp.lt.s32.totalorder %s2139, 7
        %s2143 = scalar_select %p2142, %s2139, 7
        %s2144 = smul.addr %s2141, 8
        %s2145 = sadd.s32 %s2143, %s2144
        %s2146 = smul.addr %s2145, 8
        %s2147 = scalar_lea.vmem %s5, %s2146
      $region76: #{down_forward.1} parent=71 // pred_fallthru
        _
    $region72: #{down_forward.1} parent=5 // pred_fallthru
      _
  $region6: #{down_forward.1} parent=0 // loop_footer
    %s15 = sadd.s32 1, %s11
  $region7: #{down_forward.1} parent=0 // loop_footer_branch
    %10 = sbr.rel target = $region3
  $region8: #{down_forward.1} parent=0 // loop_exit
    _

</llo_original>
